<compile_context>
chip_gen: v5e
topology: v5e:2x2
jax: 0.10.0
libtpu: 0.0.40
codegen_flags: <defaults>
</compile_context>

<pallas_src>
import functools

import numpy as np
import jax
import jax.numpy as jnp
from jax.experimental import pallas as pl


# ---------------------------------------------------------------------------
# DTCWT filter banks (deterministic constants: dtcwt "near_sym_a" / "qshift_a")
# ---------------------------------------------------------------------------
SQRT2 = float(np.sqrt(2.0))
NORMALIZE = True  # murenn.DTCWT(normalize=True): every level >= 2 is scaled by 1/sqrt(2)

# Level-1 biorthogonal (5,7)-tap analysis filters ("near_sym_a").
H0O = [-0.05, 0.25, 0.6, 0.25, -0.05]
H1O = [-0.01071428571428571, 0.05357142857142857, 0.26071428571428573,
       -0.6071428571428571, 0.26071428571428573, 0.05357142857142857,
       -0.01071428571428571]

# Level>=2 10-tap Q-shift analysis filters ("qshift_a"), tree-a lowpass.
_H0A = [0.0511304052838317, -0.0139753702468888, -0.109836051665971,
        0.263839561058938, 0.766628467793037, 0.563655710127052,
        0.000873622695217097, -0.100231219507476, -0.00168968127252815,
        -0.00618188189211644]
_H0B = _H0A[::-1]
# Alternating-flip highpass companions; only the bandpass sign/phase differs from the dtcwt
# tables, which the torch.abs() in the forward removes (these re/im are only valid post-abs).
_H1A = [((-1.0) ** n) * v for n, v in enumerate(_H0B)]
_H1B = [-((-1.0) ** n) * v for n, v in enumerate(_H0A)]

if NORMALIZE:  # fold the per-level 1/sqrt(2) into the q-shift taps
    _s = 1.0 / SQRT2
    H0A = [v * _s for v in _H0A]
    H0B = [v * _s for v in _H0B]
    H1A = [v * _s for v in _H1A]
    H1B = [v * _s for v in _H1B]
else:
    H0A, H0B, H1A, H1B = _H0A, _H0B, _H1A, _H1B

# Reversed taps: out[n] = sum_k taps_rev[k] * x_ext[n + k]  (== convolution with taps)
H0O_R = np.array(H0O[::-1], np.float64)
H1O_R = np.array(H1O[::-1], np.float64)
H0A_R = np.array(H0A[::-1], np.float64)
H0B_R = np.array(H0B[::-1], np.float64)
H1A_R = np.array(H1A[::-1], np.float64)
H1B_R = np.array(H1B[::-1], np.float64)


# ---------------------------------------------------------------------------
# Trace-time (numpy, float64) builders for the fixed DTCWT linear maps.
# Each stage acts independently per row and linearly along the last (time) axis, so
# applying it to an identity matrix yields M with   stage(x) == x @ M.
# ---------------------------------------------------------------------------
def _np_sym_ext(x, p):
    """Symmetric (edge-repeat) extension by p samples each side of the last axis."""
    assert p <= x.shape[-1]
    head = x[:, :p][:, ::-1]
    tail = x[:, -p:][:, ::-1]
    return np.concatenate([head, x, tail], axis=-1)


def _np_fir(ext, taps_rev, offset, n_out):
    """y[:, t] = sum_k taps_rev[k] * ext[:, t + offset + k]."""
    y = np.zeros((ext.shape[0], n_out))
    for k, c in enumerate(taps_rev):
        y += c * ext[:, offset + k: offset + k + n_out]
    return y


def _np_level1(x):
    """Level-1 analysis: length-preserving H1O (bandpass) and H0O (lowpass) colfilters."""
    T = x.shape[-1]
    ext = _np_sym_ext(x, 3)
    hi = _np_fir(ext, H1O_R, 0, T)
    lo = _np_fir(ext, H0O_R, 1, T)
    return hi, lo


def _np_colfilter_lo(x):
    """Length-preserving H0O colfilter with symmetric extension (down-tree level 1)."""
    T = x.shape[-1]
    ext = _np_sym_ext(x, 2)
    return _np_fir(ext, H0O_R, 0, T)


def _np_coldfilt(lo):
    """One q-shift dual-tree level (decimate by 2) on the full-rate lowpass `lo` (rows, L).
    Returns (re, im, lo_next): bandpass real/imag phases (rows, L//4) and the decimated,
    interleaved lowpass (rows, L//2).  Mirrors the previous polyphase kernel exactly."""
    rows, L = lo.shape
    assert L % 4 == 0 and L // 2 >= 6, "coldfilt needs length % 4 == 0 and >= 12"
    lo_e, lo_o = lo[:, 0::2], lo[:, 1::2]
    x0 = np.concatenate([lo_o[:, :4][:, ::-1], lo_e, lo_o[:, -5:][:, ::-1]], axis=-1)
    x1 = np.concatenate([lo_e[:, :4][:, ::-1], lo_o, lo_e[:, -5:][:, ::-1]], axis=-1)
    n = L // 4
    re = np.zeros((rows, n))
    im = np.zeros((rows, n))
    loE = np.zeros((rows, n))
    loO = np.zeros((rows, n))
    for k in range(10):
        s0 = x0[:, k:k + 2 * n:2]
        s1 = x1[:, k:k + 2 * n:2]
        re += H1A_R[k] * s1
        im += H1B_R[k] * s0
        loE += H0B_R[k] * s0
        loO += H0A_R[k] * s1
    lo_next = np.zeros((rows, L // 2))
    lo_next[:, 0::2] = loE
    lo_next[:, 1::2] = loO
    return re, im, lo_next


def _build_matrices(T, J, K, dtype=np.float32):
    """Composite per-branch linear maps.

    Returns (M_bp, G):
      M_bp[j]: (T, 2*L_j)  with  x2d @ M_bp[j] == [re_j | im_j]        (L_j = T / 2**(j+1))
      G[j]:    (L_j, K*N)  with  mag_j @ G[j] == [Z_0 | ... | Z_{K-1}],
               Z_k = down_tree_j(shift_k(mag_j)) (Conv1d 'same' zero pad folded in),
               so y_{j,q} = sum_k w[j, q, :, k] * Z_k                   (N = T / 2**J).
    """
    N = T >> J
    left = (K - 1) // 2                                 # torch Conv1d padding='same', even K
    hi1, lo1 = _np_level1(np.eye(T))
    re_mats = [hi1[:, 0::2]]
    im_mats = [hi1[:, 1::2]]
    P = lo1                                             # maps x -> current full-rate lowpass
    for _lev in range(2, J + 1):
        L = P.shape[1]
        c_re, c_im, c_lo = _np_coldfilt(np.eye(L))
        re_mats.append(P @ c_re)
        im_mats.append(P @ c_im)
        P = P @ c_lo

    M_bp, G = [], []
    for j in range(J):
        Lj = T >> (j + 1)
        D = _np_colfilter_lo(np.eye(Lj))                # down-tree level 1 (non-decimating)
        cur = Lj
        for _ in range(J - j - 1):                      # remaining lowpass-only q-shift levels
            _, _, c_lo = _np_coldfilt(np.eye(cur))
            D = D @ c_lo
            cur //= 2
        assert D.shape == (Lj, N)
        Gj = np.zeros((Lj, K * N))
        for k in range(K):
            # (mag @ Pk)[t] == magpad[t + k] == mag[t + k - left] (zero outside), so the
            # grouped conv's zero 'same' padding is folded into the constant matrices.
            Pk = np.zeros((Lj, Lj))
            for t in range(Lj):
                i = t + k - left
                if 0 <= i < Lj:
                    Pk[i, t] = 1.0
            Gj[:, k * N:(k + 1) * N] = Pk @ D
        M_bp.append(np.concatenate([re_mats[j], im_mats[j]], axis=1).astype(dtype))
        G.append(Gj.astype(dtype))
    return M_bp, G


# ---------------------------------------------------------------------------
# The single fused Pallas kernel
# ---------------------------------------------------------------------------
def _murenn_fused_kernel(*refs, J, Q, K, N, Ls):
    """refs = (x, w, M_0, G_0, ..., M_{J-1}, G_{J-1}, out); grid=(), everything VMEM-resident.

    Per scale j: [re|im] = x @ M_j (MXU), mag = sqrt(re^2+im^2) (EUP/VPU),
    Z = mag @ G_j (MXU, all K conv shifts + the whole down DTCWT folded in), then the learned
    grouped Conv1d is the per-row weighted sum y_q = sum_k w[j,q,:,k] * Z_k (VPU)."""
    x_ref, w_ref = refs[0], refs[1]
    out_ref = refs[2 + 2 * J]
    x = x_ref[...]                                      # (R, T)
    w = w_ref[...]                                      # (J*Q, R, K), loaded once into vregs
    for j in range(J):
        L = Ls[j]
        m = refs[2 + 2 * j][...]                        # (T, 2*L)
        g = refs[3 + 2 * j][...]                        # (L, K*N)
        rei = jnp.dot(x, m, preferred_element_type=jnp.float32)     # (R, 2L)
        re = rei[:, :L]
        im = rei[:, L:]
        mag = jnp.sqrt(re * re + im * im)               # torch.abs of the complex bandpass
        z = jnp.dot(mag, g, preferred_element_type=jnp.float32)     # (R, K*N)
        for q in range(Q):
            wq = w[j * Q + q]                           # (R, K) register slice, no VMEM reload
            acc = None
            for k in range(K):                          # grouped Conv1d: per-row scalar * Z_k
                term = wq[:, k:k + 1] * z[:, k * N:(k + 1) * N]
                acc = term if acc is None else acc + term
            col = (q * J + j) * N                       # final (q, j, n) column order
            out_ref[:, col:col + N] = acc.astype(out_ref.dtype)


# ---------------------------------------------------------------------------
# MuReNNDirect forward
# ---------------------------------------------------------------------------
def murenn_direct_forward(x, conv_w, *, J):
    """x: (B, C, T);  conv_w: (J, C, Q, K) with conv_w[j, c, q] == torch weight[c*Q+q, 0];
    returns (B, C, Q, J, T // 2**J)."""
    B, C, T = x.shape
    Jw, Cw, Q, K = conv_w.shape
    assert Jw == J and Cw == C and T % (2 ** J) == 0
    R, N = B * C, T >> J
    Ls = tuple(T >> (j + 1) for j in range(J))

    x2d = x.reshape(R, T)                               # (batch, channel) onto sublanes
    # Per-row conv taps, tiled over batch: w_rows[j*Q + q, b*C + c, :] = conv_w[j, c, q, :]
    w_rows = jnp.tile(jnp.transpose(conv_w, (0, 2, 1, 3)), (1, 1, B, 1)).reshape(J * Q, R, K)

    M_bp, G = _build_matrices(T, J, K, dtype=np.float32)   # trace-time numpy constants
    operands = [x2d, w_rows]
    for j in range(J):
        operands += [jnp.asarray(M_bp[j]), jnp.asarray(G[j])]

    out = pl.pallas_call(
        functools.partial(_murenn_fused_kernel, J=J, Q=Q, K=K, N=N, Ls=Ls),
        out_shape=jax.ShapeDtypeStruct((R, Q * J * N), x.dtype),
        # grid=(): one invocation; every operand/output is a single whole-array VMEM block.
        # TODO(synk): for long signals add a time-tiled grid with a "parallel" axis (v7x dual
        #             TensorCores) and an explicit vmem_limit_bytes for v7x's 64 MiB VMEM.
    )(*operands)
    # row = b*C + c, column = (q*J + j)*N + n  ->  bit-compatible reshape, no transpose.
    return out.reshape(B, C, Q, J, N)


# ---------------------------------------------------------------------------
# Float64 numpy reference (same math, no Pallas) used as a runtime sanity check.
# ---------------------------------------------------------------------------
def _reference_forward_np(x, conv_w, J):
    B, C, T = x.shape
    _, _, Q, K = conv_w.shape
    R, N = B * C, T >> J
    x2 = np.asarray(x, np.float64).reshape(R, T)
    w = np.asarray(conv_w, np.float64)
    M_bp, G = _build_matrices(T, J, K, dtype=np.float64)
    out = np.zeros((R, Q * J * N))
    for j in range(J):
        L = T >> (j + 1)
        rei = x2 @ M_bp[j]
        mag = np.sqrt(rei[:, :L] ** 2 + rei[:, L:] ** 2)
        z = mag @ G[j]
        for q in range(Q):
            acc = np.zeros((R, N))
            for k in range(K):
                wk = np.tile(w[j, :, q, k], B)[:, None]          # (R, 1) per-row tap
                acc += wk * z[:, k * N:(k + 1) * N]
            out[:, (q * J + j) * N:(q * J + j + 1) * N] = acc
    return out.reshape(B, C, Q, J, N)


if __name__ == "__main__":
    J, Q, K = 3, 3, 8          # wavelet scales, filters/channel, Conv1d kernel_size ("T" ctor arg)
    B, C, T = 2, 4, 64         # batch, in_channels, time samples (multiple of 2**J)

    key = jax.random.PRNGKey(0)
    kx, kw = jax.random.split(key)
    x = jax.random.normal(kx, (B, C, T), dtype=jnp.float32)
    # torch.nn.init.normal_(conv1d.weight): conv_w[j, c, q, :] == weight[c*Q + q, 0, :]
    conv_w = jax.random.normal(kw, (J, C, Q, K), dtype=jnp.float32)

    fwd = jax.jit(functools.partial(murenn_direct_forward, J=J))
    y = jax.block_until_ready(fwd(x, conv_w))

    assert y.shape == (B, C, Q, J, T // 2 ** J), y.shape
    assert y.dtype == jnp.float32
    assert bool(jnp.all(jnp.isfinite(y)))
    y_ref = _reference_forward_np(np.asarray(x), np.asarray(conv_w), J)
    err = float(np.max(np.abs(np.asarray(y, np.float64) - y_ref)))
    assert np.allclose(np.asarray(y), y_ref, rtol=2e-2, atol=2e-2), err
    print("KERNEL_OK")
</pallas_src>

<mosaic_0001>
module attributes {stable_mosaic.version = 11 : i64} {
  func.func @_murenn_fused_kernel(%arg0: memref<8x64xf32, #tpu.memory_space<vmem>>, %arg1: memref<9x8x8xf32, #tpu.memory_space<vmem>>, %arg2: memref<64x64xf32, #tpu.memory_space<vmem>>, %arg3: memref<32x64xf32, #tpu.memory_space<vmem>>, %arg4: memref<64x32xf32, #tpu.memory_space<vmem>>, %arg5: memref<16x64xf32, #tpu.memory_space<vmem>>, %arg6: memref<64x16xf32, #tpu.memory_space<vmem>>, %arg7: memref<8x64xf32, #tpu.memory_space<vmem>>, %arg8: memref<8x72xf32, #tpu.memory_space<vmem>>) attributes {dimension_semantics = [], scalar_prefetch = 0 : i64, scratch_operands = 0 : i64, tpu.core_type = #tpu.core_type<tc>} {
    %c0 = arith.constant 0 : index
    %c0_0 = arith.constant 0 : index
    %0 = vector.load %arg0[%c0, %c0_0] : memref<8x64xf32, #tpu.memory_space<vmem>>, vector<8x64xf32>
    %c0_1 = arith.constant 0 : index
    %c0_2 = arith.constant 0 : index
    %c0_3 = arith.constant 0 : index
    %1 = vector.load %arg1[%c0_1, %c0_2, %c0_3] : memref<9x8x8xf32, #tpu.memory_space<vmem>>, vector<9x8x8xf32>
    %c0_4 = arith.constant 0 : index
    %c0_5 = arith.constant 0 : index
    %2 = vector.load %arg2[%c0_4, %c0_5] : memref<64x64xf32, #tpu.memory_space<vmem>>, vector<64x64xf32>
    %c0_6 = arith.constant 0 : index
    %c0_7 = arith.constant 0 : index
    %3 = vector.load %arg3[%c0_6, %c0_7] : memref<32x64xf32, #tpu.memory_space<vmem>>, vector<32x64xf32>
    %cst = arith.constant dense<0.000000e+00> : vector<8x64xf32>
    %4 = tpu.matmul %0, %2, %cst {dimension_numbers = #tpu.dot_dimension_numbers<[1], [0], [0], [1], [0, 0, 1, 1], [], []>} : vector<8x64xf32>, vector<64x64xf32>, vector<8x64xf32> -> vector<8x64xf32>
    %5 = vector.extract_strided_slice %4 {offsets = [0, 0], sizes = [8, 32], strides = [1, 1]} : vector<8x64xf32> to vector<8x32xf32>
    %6 = vector.extract_strided_slice %4 {offsets = [0, 32], sizes = [8, 32], strides = [1, 1]} : vector<8x64xf32> to vector<8x32xf32>
    %7 = arith.mulf %5, %5 : vector<8x32xf32>
    %8 = arith.mulf %6, %6 : vector<8x32xf32>
    %9 = arith.addf %7, %8 : vector<8x32xf32>
    %10 = math.sqrt %9 : vector<8x32xf32>
    %cst_8 = arith.constant dense<0.000000e+00> : vector<8x64xf32>
    %11 = tpu.matmul %10, %3, %cst_8 {dimension_numbers = #tpu.dot_dimension_numbers<[1], [0], [0], [1], [0, 0, 1, 1], [], []>} : vector<8x32xf32>, vector<32x64xf32>, vector<8x64xf32> -> vector<8x64xf32>
    %12 = vector.extract_strided_slice %1 {offsets = [0, 0, 0], sizes = [1, 8, 8], strides = [1, 1, 1]} : vector<9x8x8xf32> to vector<1x8x8xf32>
    %13 = vector.shape_cast %12 : vector<1x8x8xf32> to vector<8x8xf32>
    %14 = vector.extract_strided_slice %13 {offsets = [0, 0], sizes = [8, 1], strides = [1, 1]} : vector<8x8xf32> to vector<8x1xf32>
    %15 = vector.extract_strided_slice %11 {offsets = [0, 0], sizes = [8, 8], strides = [1, 1]} : vector<8x64xf32> to vector<8x8xf32>
    %16 = vector.broadcast %14 : vector<8x1xf32> to vector<8x8xf32>
    %17 = arith.mulf %16, %15 : vector<8x8xf32>
    %18 = vector.extract_strided_slice %13 {offsets = [0, 1], sizes = [8, 1], strides = [1, 1]} : vector<8x8xf32> to vector<8x1xf32>
    %19 = vector.extract_strided_slice %11 {offsets = [0, 8], sizes = [8, 8], strides = [1, 1]} : vector<8x64xf32> to vector<8x8xf32>
    %20 = vector.broadcast %18 : vector<8x1xf32> to vector<8x8xf32>
    %21 = arith.mulf %20, %19 : vector<8x8xf32>
    %22 = arith.addf %17, %21 : vector<8x8xf32>
    %23 = vector.extract_strided_slice %13 {offsets = [0, 2], sizes = [8, 1], strides = [1, 1]} : vector<8x8xf32> to vector<8x1xf32>
    %24 = vector.extract_strided_slice %11 {offsets = [0, 16], sizes = [8, 8], strides = [1, 1]} : vector<8x64xf32> to vector<8x8xf32>
    %25 = vector.broadcast %23 : vector<8x1xf32> to vector<8x8xf32>
    %26 = arith.mulf %25, %24 : vector<8x8xf32>
    %27 = arith.addf %22, %26 : vector<8x8xf32>
    %28 = vector.extract_strided_slice %13 {offsets = [0, 3], sizes = [8, 1], strides = [1, 1]} : vector<8x8xf32> to vector<8x1xf32>
    %29 = vector.extract_strided_slice %11 {offsets = [0, 24], sizes = [8, 8], strides = [1, 1]} : vector<8x64xf32> to vector<8x8xf32>
    %30 = vector.broadcast %28 : vector<8x1xf32> to vector<8x8xf32>
    %31 = arith.mulf %30, %29 : vector<8x8xf32>
    %32 = arith.addf %27, %31 : vector<8x8xf32>
    %33 = vector.extract_strided_slice %13 {offsets = [0, 4], sizes = [8, 1], strides = [1, 1]} : vector<8x8xf32> to vector<8x1xf32>
    %34 = vector.extract_strided_slice %11 {offsets = [0, 32], sizes = [8, 8], strides = [1, 1]} : vector<8x64xf32> to vector<8x8xf32>
    %35 = vector.broadcast %33 : vector<8x1xf32> to vector<8x8xf32>
    %36 = arith.mulf %35, %34 : vector<8x8xf32>
    %37 = arith.addf %32, %36 : vector<8x8xf32>
    %38 = vector.extract_strided_slice %13 {offsets = [0, 5], sizes = [8, 1], strides = [1, 1]} : vector<8x8xf32> to vector<8x1xf32>
    %39 = vector.extract_strided_slice %11 {offsets = [0, 40], sizes = [8, 8], strides = [1, 1]} : vector<8x64xf32> to vector<8x8xf32>
    %40 = vector.broadcast %38 : vector<8x1xf32> to vector<8x8xf32>
    %41 = arith.mulf %40, %39 : vector<8x8xf32>
    %42 = arith.addf %37, %41 : vector<8x8xf32>
    %43 = vector.extract_strided_slice %13 {offsets = [0, 6], sizes = [8, 1], strides = [1, 1]} : vector<8x8xf32> to vector<8x1xf32>
    %44 = vector.extract_strided_slice %11 {offsets = [0, 48], sizes = [8, 8], strides = [1, 1]} : vector<8x64xf32> to vector<8x8xf32>
    %45 = vector.broadcast %43 : vector<8x1xf32> to vector<8x8xf32>
    %46 = arith.mulf %45, %44 : vector<8x8xf32>
    %47 = arith.addf %42, %46 : vector<8x8xf32>
    %48 = vector.extract_strided_slice %13 {offsets = [0, 7], sizes = [8, 1], strides = [1, 1]} : vector<8x8xf32> to vector<8x1xf32>
    %49 = vector.extract_strided_slice %11 {offsets = [0, 56], sizes = [8, 8], strides = [1, 1]} : vector<8x64xf32> to vector<8x8xf32>
    %50 = vector.broadcast %48 : vector<8x1xf32> to vector<8x8xf32>
    %51 = arith.mulf %50, %49 : vector<8x8xf32>
    %52 = arith.addf %47, %51 : vector<8x8xf32>
    %c0_9 = arith.constant 0 : index
    %c0_10 = arith.constant 0 : index
    %53 = vector.load %arg8[%c0_9, %c0_10] : memref<8x72xf32, #tpu.memory_space<vmem>>, vector<8x8xf32>
    tpu.vector_store %arg8[%c0_9, %c0_10], %52 {strides = array<i32>} : memref<8x72xf32, #tpu.memory_space<vmem>>, vector<8x8xf32>,
    %54 = vector.extract_strided_slice %1 {offsets = [1, 0, 0], sizes = [1, 8, 8], strides = [1, 1, 1]} : vector<9x8x8xf32> to vector<1x8x8xf32>
    %55 = vector.shape_cast %54 : vector<1x8x8xf32> to vector<8x8xf32>
    %56 = vector.extract_strided_slice %55 {offsets = [0, 0], sizes = [8, 1], strides = [1, 1]} : vector<8x8xf32> to vector<8x1xf32>
    %57 = vector.extract_strided_slice %11 {offsets = [0, 0], sizes = [8, 8], strides = [1, 1]} : vector<8x64xf32> to vector<8x8xf32>
    %58 = vector.broadcast %56 : vector<8x1xf32> to vector<8x8xf32>
    %59 = arith.mulf %58, %57 : vector<8x8xf32>
    %60 = vector.extract_strided_slice %55 {offsets = [0, 1], sizes = [8, 1], strides = [1, 1]} : vector<8x8xf32> to vector<8x1xf32>
    %61 = vector.extract_strided_slice %11 {offsets = [0, 8], sizes = [8, 8], strides = [1, 1]} : vector<8x64xf32> to vector<8x8xf32>
    %62 = vector.broadcast %60 : vector<8x1xf32> to vector<8x8xf32>
    %63 = arith.mulf %62, %61 : vector<8x8xf32>
    %64 = arith.addf %59, %63 : vector<8x8xf32>
    %65 = vector.extract_strided_slice %55 {offsets = [0, 2], sizes = [8, 1], strides = [1, 1]} : vector<8x8xf32> to vector<8x1xf32>
    %66 = vector.extract_strided_slice %11 {offsets = [0, 16], sizes = [8, 8], strides = [1, 1]} : vector<8x64xf32> to vector<8x8xf32>
    %67 = vector.broadcast %65 : vector<8x1xf32> to vector<8x8xf32>
    %68 = arith.mulf %67, %66 : vector<8x8xf32>
    %69 = arith.addf %64, %68 : vector<8x8xf32>
    %70 = vector.extract_strided_slice %55 {offsets = [0, 3], sizes = [8, 1], strides = [1, 1]} : vector<8x8xf32> to vector<8x1xf32>
    %71 = vector.extract_strided_slice %11 {offsets = [0, 24], sizes = [8, 8], strides = [1, 1]} : vector<8x64xf32> to vector<8x8xf32>
    %72 = vector.broadcast %70 : vector<8x1xf32> to vector<8x8xf32>
    %73 = arith.mulf %72, %71 : vector<8x8xf32>
    %74 = arith.addf %69, %73 : vector<8x8xf32>
    %75 = vector.extract_strided_slice %55 {offsets = [0, 4], sizes = [8, 1], strides = [1, 1]} : vector<8x8xf32> to vector<8x1xf32>
    %76 = vector.extract_strided_slice %11 {offsets = [0, 32], sizes = [8, 8], strides = [1, 1]} : vector<8x64xf32> to vector<8x8xf32>
    %77 = vector.broadcast %75 : vector<8x1xf32> to vector<8x8xf32>
    %78 = arith.mulf %77, %76 : vector<8x8xf32>
    %79 = arith.addf %74, %78 : vector<8x8xf32>
    %80 = vector.extract_strided_slice %55 {offsets = [0, 5], sizes = [8, 1], strides = [1, 1]} : vector<8x8xf32> to vector<8x1xf32>
    %81 = vector.extract_strided_slice %11 {offsets = [0, 40], sizes = [8, 8], strides = [1, 1]} : vector<8x64xf32> to vector<8x8xf32>
    %82 = vector.broadcast %80 : vector<8x1xf32> to vector<8x8xf32>
    %83 = arith.mulf %82, %81 : vector<8x8xf32>
    %84 = arith.addf %79, %83 : vector<8x8xf32>
    %85 = vector.extract_strided_slice %55 {offsets = [0, 6], sizes = [8, 1], strides = [1, 1]} : vector<8x8xf32> to vector<8x1xf32>
    %86 = vector.extract_strided_slice %11 {offsets = [0, 48], sizes = [8, 8], strides = [1, 1]} : vector<8x64xf32> to vector<8x8xf32>
    %87 = vector.broadcast %85 : vector<8x1xf32> to vector<8x8xf32>
    %88 = arith.mulf %87, %86 : vector<8x8xf32>
    %89 = arith.addf %84, %88 : vector<8x8xf32>
    %90 = vector.extract_strided_slice %55 {offsets = [0, 7], sizes = [8, 1], strides = [1, 1]} : vector<8x8xf32> to vector<8x1xf32>
    %91 = vector.extract_strided_slice %11 {offsets = [0, 56], sizes = [8, 8], strides = [1, 1]} : vector<8x64xf32> to vector<8x8xf32>
    %92 = vector.broadcast %90 : vector<8x1xf32> to vector<8x8xf32>
    %93 = arith.mulf %92, %91 : vector<8x8xf32>
    %94 = arith.addf %89, %93 : vector<8x8xf32>
    %c0_11 = arith.constant 0 : index
    %c24 = arith.constant 24 : index
    %95 = vector.load %arg8[%c0_11, %c24] : memref<8x72xf32, #tpu.memory_space<vmem>>, vector<8x8xf32>
    tpu.vector_store %arg8[%c0_11, %c24], %94 {strides = array<i32>} : memref<8x72xf32, #tpu.memory_space<vmem>>, vector<8x8xf32>,
    %96 = vector.extract_strided_slice %1 {offsets = [2, 0, 0], sizes = [1, 8, 8], strides = [1, 1, 1]} : vector<9x8x8xf32> to vector<1x8x8xf32>
    %97 = vector.shape_cast %96 : vector<1x8x8xf32> to vector<8x8xf32>
    %98 = vector.extract_strided_slice %97 {offsets = [0, 0], sizes = [8, 1], strides = [1, 1]} : vector<8x8xf32> to vector<8x1xf32>
    %99 = vector.extract_strided_slice %11 {offsets = [0, 0], sizes = [8, 8], strides = [1, 1]} : vector<8x64xf32> to vector<8x8xf32>
    %100 = vector.broadcast %98 : vector<8x1xf32> to vector<8x8xf32>
    %101 = arith.mulf %100, %99 : vector<8x8xf32>
    %102 = vector.extract_strided_slice %97 {offsets = [0, 1], sizes = [8, 1], strides = [1, 1]} : vector<8x8xf32> to vector<8x1xf32>
    %103 = vector.extract_strided_slice %11 {offsets = [0, 8], sizes = [8, 8], strides = [1, 1]} : vector<8x64xf32> to vector<8x8xf32>
    %104 = vector.broadcast %102 : vector<8x1xf32> to vector<8x8xf32>
    %105 = arith.mulf %104, %103 : vector<8x8xf32>
    %106 = arith.addf %101, %105 : vector<8x8xf32>
    %107 = vector.extract_strided_slice %97 {offsets = [0, 2], sizes = [8, 1], strides = [1, 1]} : vector<8x8xf32> to vector<8x1xf32>
    %108 = vector.extract_strided_slice %11 {offsets = [0, 16], sizes = [8, 8], strides = [1, 1]} : vector<8x64xf32> to vector<8x8xf32>
    %109 = vector.broadcast %107 : vector<8x1xf32> to vector<8x8xf32>
    %110 = arith.mulf %109, %108 : vector<8x8xf32>
    %111 = arith.addf %106, %110 : vector<8x8xf32>
    %112 = vector.extract_strided_slice %97 {offsets = [0, 3], sizes = [8, 1], strides = [1, 1]} : vector<8x8xf32> to vector<8x1xf32>
    %113 = vector.extract_strided_slice %11 {offsets = [0, 24], sizes = [8, 8], strides = [1, 1]} : vector<8x64xf32> to vector<8x8xf32>
    %114 = vector.broadcast %112 : vector<8x1xf32> to vector<8x8xf32>
    %115 = arith.mulf %114, %113 : vector<8x8xf32>
    %116 = arith.addf %111, %115 : vector<8x8xf32>
    %117 = vector.extract_strided_slice %97 {offsets = [0, 4], sizes = [8, 1], strides = [1, 1]} : vector<8x8xf32> to vector<8x1xf32>
    %118 = vector.extract_strided_slice %11 {offsets = [0, 32], sizes = [8, 8], strides = [1, 1]} : vector<8x64xf32> to vector<8x8xf32>
    %119 = vector.broadcast %117 : vector<8x1xf32> to vector<8x8xf32>
    %120 = arith.mulf %119, %118 : vector<8x8xf32>
    %121 = arith.addf %116, %120 : vector<8x8xf32>
    %122 = vector.extract_strided_slice %97 {offsets = [0, 5], sizes = [8, 1], strides = [1, 1]} : vector<8x8xf32> to vector<8x1xf32>
    %123 = vector.extract_strided_slice %11 {offsets = [0, 40], sizes = [8, 8], strides = [1, 1]} : vector<8x64xf32> to vector<8x8xf32>
    %124 = vector.broadcast %122 : vector<8x1xf32> to vector<8x8xf32>
    %125 = arith.mulf %124, %123 : vector<8x8xf32>
    %126 = arith.addf %121, %125 : vector<8x8xf32>
    %127 = vector.extract_strided_slice %97 {offsets = [0, 6], sizes = [8, 1], strides = [1, 1]} : vector<8x8xf32> to vector<8x1xf32>
    %128 = vector.extract_strided_slice %11 {offsets = [0, 48], sizes = [8, 8], strides = [1, 1]} : vector<8x64xf32> to vector<8x8xf32>
    %129 = vector.broadcast %127 : vector<8x1xf32> to vector<8x8xf32>
    %130 = arith.mulf %129, %128 : vector<8x8xf32>
    %131 = arith.addf %126, %130 : vector<8x8xf32>
    %132 = vector.extract_strided_slice %97 {offsets = [0, 7], sizes = [8, 1], strides = [1, 1]} : vector<8x8xf32> to vector<8x1xf32>
    %133 = vector.extract_strided_slice %11 {offsets = [0, 56], sizes = [8, 8], strides = [1, 1]} : vector<8x64xf32> to vector<8x8xf32>
    %134 = vector.broadcast %132 : vector<8x1xf32> to vector<8x8xf32>
    %135 = arith.mulf %134, %133 : vector<8x8xf32>
    %136 = arith.addf %131, %135 : vector<8x8xf32>
    %c0_12 = arith.constant 0 : index
    %c48 = arith.constant 48 : index
    %137 = vector.load %arg8[%c0_12, %c48] : memref<8x72xf32, #tpu.memory_space<vmem>>, vector<8x8xf32>
    tpu.vector_store %arg8[%c0_12, %c48], %136 {strides = array<i32>} : memref<8x72xf32, #tpu.memory_space<vmem>>, vector<8x8xf32>,
    %c0_13 = arith.constant 0 : index
    %c0_14 = arith.constant 0 : index
    %138 = vector.load %arg4[%c0_13, %c0_14] : memref<64x32xf32, #tpu.memory_space<vmem>>, vector<64x32xf32>
    %c0_15 = arith.constant 0 : index
    %c0_16 = arith.constant 0 : index
    %139 = vector.load %arg5[%c0_15, %c0_16] : memref<16x64xf32, #tpu.memory_space<vmem>>, vector<16x64xf32>
    %cst_17 = arith.constant dense<0.000000e+00> : vector<8x32xf32>
    %140 = tpu.matmul %0, %138, %cst_17 {dimension_numbers = #tpu.dot_dimension_numbers<[1], [0], [0], [1], [0, 0, 1, 1], [], []>} : vector<8x64xf32>, vector<64x32xf32>, vector<8x32xf32> -> vector<8x32xf32>
    %141 = vector.extract_strided_slice %140 {offsets = [0, 0], sizes = [8, 16], strides = [1, 1]} : vector<8x32xf32> to vector<8x16xf32>
    %142 = vector.extract_strided_slice %140 {offsets = [0, 16], sizes = [8, 16], strides = [1, 1]} : vector<8x32xf32> to vector<8x16xf32>
    %143 = arith.mulf %141, %141 : vector<8x16xf32>
    %144 = arith.mulf %142, %142 : vector<8x16xf32>
    %145 = arith.addf %143, %144 : vector<8x16xf32>
    %146 = math.sqrt %145 : vector<8x16xf32>
    %cst_18 = arith.constant dense<0.000000e+00> : vector<8x64xf32>
    %147 = tpu.matmul %146, %139, %cst_18 {dimension_numbers = #tpu.dot_dimension_numbers<[1], [0], [0], [1], [0, 0, 1, 1], [], []>} : vector<8x16xf32>, vector<16x64xf32>, vector<8x64xf32> -> vector<8x64xf32>
    %148 = vector.extract_strided_slice %1 {offsets = [3, 0, 0], sizes = [1, 8, 8], strides = [1, 1, 1]} : vector<9x8x8xf32> to vector<1x8x8xf32>
    %149 = vector.shape_cast %148 : vector<1x8x8xf32> to vector<8x8xf32>
    %150 = vector.extract_strided_slice %149 {offsets = [0, 0], sizes = [8, 1], strides = [1, 1]} : vector<8x8xf32> to vector<8x1xf32>
    %151 = vector.extract_strided_slice %147 {offsets = [0, 0], sizes = [8, 8], strides = [1, 1]} : vector<8x64xf32> to vector<8x8xf32>
    %152 = vector.broadcast %150 : vector<8x1xf32> to vector<8x8xf32>
    %153 = arith.mulf %152, %151 : vector<8x8xf32>
    %154 = vector.extract_strided_slice %149 {offsets = [0, 1], sizes = [8, 1], strides = [1, 1]} : vector<8x8xf32> to vector<8x1xf32>
    %155 = vector.extract_strided_slice %147 {offsets = [0, 8], sizes = [8, 8], strides = [1, 1]} : vector<8x64xf32> to vector<8x8xf32>
    %156 = vector.broadcast %154 : vector<8x1xf32> to vector<8x8xf32>
    %157 = arith.mulf %156, %155 : vector<8x8xf32>
    %158 = arith.addf %153, %157 : vector<8x8xf32>
    %159 = vector.extract_strided_slice %149 {offsets = [0, 2], sizes = [8, 1], strides = [1, 1]} : vector<8x8xf32> to vector<8x1xf32>
    %160 = vector.extract_strided_slice %147 {offsets = [0, 16], sizes = [8, 8], strides = [1, 1]} : vector<8x64xf32> to vector<8x8xf32>
    %161 = vector.broadcast %159 : vector<8x1xf32> to vector<8x8xf32>
    %162 = arith.mulf %161, %160 : vector<8x8xf32>
    %163 = arith.addf %158, %162 : vector<8x8xf32>
    %164 = vector.extract_strided_slice %149 {offsets = [0, 3], sizes = [8, 1], strides = [1, 1]} : vector<8x8xf32> to vector<8x1xf32>
    %165 = vector.extract_strided_slice %147 {offsets = [0, 24], sizes = [8, 8], strides = [1, 1]} : vector<8x64xf32> to vector<8x8xf32>
    %166 = vector.broadcast %164 : vector<8x1xf32> to vector<8x8xf32>
    %167 = arith.mulf %166, %165 : vector<8x8xf32>
    %168 = arith.addf %163, %167 : vector<8x8xf32>
    %169 = vector.extract_strided_slice %149 {offsets = [0, 4], sizes = [8, 1], strides = [1, 1]} : vector<8x8xf32> to vector<8x1xf32>
    %170 = vector.extract_strided_slice %147 {offsets = [0, 32], sizes = [8, 8], strides = [1, 1]} : vector<8x64xf32> to vector<8x8xf32>
    %171 = vector.broadcast %169 : vector<8x1xf32> to vector<8x8xf32>
    %172 = arith.mulf %171, %170 : vector<8x8xf32>
    %173 = arith.addf %168, %172 : vector<8x8xf32>
    %174 = vector.extract_strided_slice %149 {offsets = [0, 5], sizes = [8, 1], strides = [1, 1]} : vector<8x8xf32> to vector<8x1xf32>
    %175 = vector.extract_strided_slice %147 {offsets = [0, 40], sizes = [8, 8], strides = [1, 1]} : vector<8x64xf32> to vector<8x8xf32>
    %176 = vector.broadcast %174 : vector<8x1xf32> to vector<8x8xf32>
    %177 = arith.mulf %176, %175 : vector<8x8xf32>
    %178 = arith.addf %173, %177 : vector<8x8xf32>
    %179 = vector.extract_strided_slice %149 {offsets = [0, 6], sizes = [8, 1], strides = [1, 1]} : vector<8x8xf32> to vector<8x1xf32>
    %180 = vector.extract_strided_slice %147 {offsets = [0, 48], sizes = [8, 8], strides = [1, 1]} : vector<8x64xf32> to vector<8x8xf32>
    %181 = vector.broadcast %179 : vector<8x1xf32> to vector<8x8xf32>
    %182 = arith.mulf %181, %180 : vector<8x8xf32>
    %183 = arith.addf %178, %182 : vector<8x8xf32>
    %184 = vector.extract_strided_slice %149 {offsets = [0, 7], sizes = [8, 1], strides = [1, 1]} : vector<8x8xf32> to vector<8x1xf32>
    %185 = vector.extract_strided_slice %147 {offsets = [0, 56], sizes = [8, 8], strides = [1, 1]} : vector<8x64xf32> to vector<8x8xf32>
    %186 = vector.broadcast %184 : vector<8x1xf32> to vector<8x8xf32>
    %187 = arith.mulf %186, %185 : vector<8x8xf32>
    %188 = arith.addf %183, %187 : vector<8x8xf32>
    %c0_19 = arith.constant 0 : index
    %c8 = arith.constant 8 : index
    %189 = vector.load %arg8[%c0_19, %c8] : memref<8x72xf32, #tpu.memory_space<vmem>>, vector<8x8xf32>
    tpu.vector_store %arg8[%c0_19, %c8], %188 {strides = array<i32>} : memref<8x72xf32, #tpu.memory_space<vmem>>, vector<8x8xf32>,
    %190 = vector.extract_strided_slice %1 {offsets = [4, 0, 0], sizes = [1, 8, 8], strides = [1, 1, 1]} : vector<9x8x8xf32> to vector<1x8x8xf32>
    %191 = vector.shape_cast %190 : vector<1x8x8xf32> to vector<8x8xf32>
    %192 = vector.extract_strided_slice %191 {offsets = [0, 0], sizes = [8, 1], strides = [1, 1]} : vector<8x8xf32> to vector<8x1xf32>
    %193 = vector.extract_strided_slice %147 {offsets = [0, 0], sizes = [8, 8], strides = [1, 1]} : vector<8x64xf32> to vector<8x8xf32>
    %194 = vector.broadcast %192 : vector<8x1xf32> to vector<8x8xf32>
    %195 = arith.mulf %194, %193 : vector<8x8xf32>
    %196 = vector.extract_strided_slice %191 {offsets = [0, 1], sizes = [8, 1], strides = [1, 1]} : vector<8x8xf32> to vector<8x1xf32>
    %197 = vector.extract_strided_slice %147 {offsets = [0, 8], sizes = [8, 8], strides = [1, 1]} : vector<8x64xf32> to vector<8x8xf32>
    %198 = vector.broadcast %196 : vector<8x1xf32> to vector<8x8xf32>
    %199 = arith.mulf %198, %197 : vector<8x8xf32>
    %200 = arith.addf %195, %199 : vector<8x8xf32>
    %201 = vector.extract_strided_slice %191 {offsets = [0, 2], sizes = [8, 1], strides = [1, 1]} : vector<8x8xf32> to vector<8x1xf32>
    %202 = vector.extract_strided_slice %147 {offsets = [0, 16], sizes = [8, 8], strides = [1, 1]} : vector<8x64xf32> to vector<8x8xf32>
    %203 = vector.broadcast %201 : vector<8x1xf32> to vector<8x8xf32>
    %204 = arith.mulf %203, %202 : vector<8x8xf32>
    %205 = arith.addf %200, %204 : vector<8x8xf32>
    %206 = vector.extract_strided_slice %191 {offsets = [0, 3], sizes = [8, 1], strides = [1, 1]} : vector<8x8xf32> to vector<8x1xf32>
    %207 = vector.extract_strided_slice %147 {offsets = [0, 24], sizes = [8, 8], strides = [1, 1]} : vector<8x64xf32> to vector<8x8xf32>
    %208 = vector.broadcast %206 : vector<8x1xf32> to vector<8x8xf32>
    %209 = arith.mulf %208, %207 : vector<8x8xf32>
    %210 = arith.addf %205, %209 : vector<8x8xf32>
    %211 = vector.extract_strided_slice %191 {offsets = [0, 4], sizes = [8, 1], strides = [1, 1]} : vector<8x8xf32> to vector<8x1xf32>
    %212 = vector.extract_strided_slice %147 {offsets = [0, 32], sizes = [8, 8], strides = [1, 1]} : vector<8x64xf32> to vector<8x8xf32>
    %213 = vector.broadcast %211 : vector<8x1xf32> to vector<8x8xf32>
    %214 = arith.mulf %213, %212 : vector<8x8xf32>
    %215 = arith.addf %210, %214 : vector<8x8xf32>
    %216 = vector.extract_strided_slice %191 {offsets = [0, 5], sizes = [8, 1], strides = [1, 1]} : vector<8x8xf32> to vector<8x1xf32>
    %217 = vector.extract_strided_slice %147 {offsets = [0, 40], sizes = [8, 8], strides = [1, 1]} : vector<8x64xf32> to vector<8x8xf32>
    %218 = vector.broadcast %216 : vector<8x1xf32> to vector<8x8xf32>
    %219 = arith.mulf %218, %217 : vector<8x8xf32>
    %220 = arith.addf %215, %219 : vector<8x8xf32>
    %221 = vector.extract_strided_slice %191 {offsets = [0, 6], sizes = [8, 1], strides = [1, 1]} : vector<8x8xf32> to vector<8x1xf32>
    %222 = vector.extract_strided_slice %147 {offsets = [0, 48], sizes = [8, 8], strides = [1, 1]} : vector<8x64xf32> to vector<8x8xf32>
    %223 = vector.broadcast %221 : vector<8x1xf32> to vector<8x8xf32>
    %224 = arith.mulf %223, %222 : vector<8x8xf32>
    %225 = arith.addf %220, %224 : vector<8x8xf32>
    %226 = vector.extract_strided_slice %191 {offsets = [0, 7], sizes = [8, 1], strides = [1, 1]} : vector<8x8xf32> to vector<8x1xf32>
    %227 = vector.extract_strided_slice %147 {offsets = [0, 56], sizes = [8, 8], strides = [1, 1]} : vector<8x64xf32> to vector<8x8xf32>
    %228 = vector.broadcast %226 : vector<8x1xf32> to vector<8x8xf32>
    %229 = arith.mulf %228, %227 : vector<8x8xf32>
    %230 = arith.addf %225, %229 : vector<8x8xf32>
    %c0_20 = arith.constant 0 : index
    %c32 = arith.constant 32 : index
    %231 = vector.load %arg8[%c0_20, %c32] : memref<8x72xf32, #tpu.memory_space<vmem>>, vector<8x8xf32>
    tpu.vector_store %arg8[%c0_20, %c32], %230 {strides = array<i32>} : memref<8x72xf32, #tpu.memory_space<vmem>>, vector<8x8xf32>,
    %232 = vector.extract_strided_slice %1 {offsets = [5, 0, 0], sizes = [1, 8, 8], strides = [1, 1, 1]} : vector<9x8x8xf32> to vector<1x8x8xf32>
    %233 = vector.shape_cast %232 : vector<1x8x8xf32> to vector<8x8xf32>
    %234 = vector.extract_strided_slice %233 {offsets = [0, 0], sizes = [8, 1], strides = [1, 1]} : vector<8x8xf32> to vector<8x1xf32>
    %235 = vector.extract_strided_slice %147 {offsets = [0, 0], sizes = [8, 8], strides = [1, 1]} : vector<8x64xf32> to vector<8x8xf32>
    %236 = vector.broadcast %234 : vector<8x1xf32> to vector<8x8xf32>
    %237 = arith.mulf %236, %235 : vector<8x8xf32>
    %238 = vector.extract_strided_slice %233 {offsets = [0, 1], sizes = [8, 1], strides = [1, 1]} : vector<8x8xf32> to vector<8x1xf32>
    %239 = vector.extract_strided_slice %147 {offsets = [0, 8], sizes = [8, 8], strides = [1, 1]} : vector<8x64xf32> to vector<8x8xf32>
    %240 = vector.broadcast %238 : vector<8x1xf32> to vector<8x8xf32>
    %241 = arith.mulf %240, %239 : vector<8x8xf32>
    %242 = arith.addf %237, %241 : vector<8x8xf32>
    %243 = vector.extract_strided_slice %233 {offsets = [0, 2], sizes = [8, 1], strides = [1, 1]} : vector<8x8xf32> to vector<8x1xf32>
    %244 = vector.extract_strided_slice %147 {offsets = [0, 16], sizes = [8, 8], strides = [1, 1]} : vector<8x64xf32> to vector<8x8xf32>
    %245 = vector.broadcast %243 : vector<8x1xf32> to vector<8x8xf32>
    %246 = arith.mulf %245, %244 : vector<8x8xf32>
    %247 = arith.addf %242, %246 : vector<8x8xf32>
    %248 = vector.extract_strided_slice %233 {offsets = [0, 3], sizes = [8, 1], strides = [1, 1]} : vector<8x8xf32> to vector<8x1xf32>
    %249 = vector.extract_strided_slice %147 {offsets = [0, 24], sizes = [8, 8], strides = [1, 1]} : vector<8x64xf32> to vector<8x8xf32>
    %250 = vector.broadcast %248 : vector<8x1xf32> to vector<8x8xf32>
    %251 = arith.mulf %250, %249 : vector<8x8xf32>
    %252 = arith.addf %247, %251 : vector<8x8xf32>
    %253 = vector.extract_strided_slice %233 {offsets = [0, 4], sizes = [8, 1], strides = [1, 1]} : vector<8x8xf32> to vector<8x1xf32>
    %254 = vector.extract_strided_slice %147 {offsets = [0, 32], sizes = [8, 8], strides = [1, 1]} : vector<8x64xf32> to vector<8x8xf32>
    %255 = vector.broadcast %253 : vector<8x1xf32> to vector<8x8xf32>
    %256 = arith.mulf %255, %254 : vector<8x8xf32>
    %257 = arith.addf %252, %256 : vector<8x8xf32>
    %258 = vector.extract_strided_slice %233 {offsets = [0, 5], sizes = [8, 1], strides = [1, 1]} : vector<8x8xf32> to vector<8x1xf32>
    %259 = vector.extract_strided_slice %147 {offsets = [0, 40], sizes = [8, 8], strides = [1, 1]} : vector<8x64xf32> to vector<8x8xf32>
    %260 = vector.broadcast %258 : vector<8x1xf32> to vector<8x8xf32>
    %261 = arith.mulf %260, %259 : vector<8x8xf32>
    %262 = arith.addf %257, %261 : vector<8x8xf32>
    %263 = vector.extract_strided_slice %233 {offsets = [0, 6], sizes = [8, 1], strides = [1, 1]} : vector<8x8xf32> to vector<8x1xf32>
    %264 = vector.extract_strided_slice %147 {offsets = [0, 48], sizes = [8, 8], strides = [1, 1]} : vector<8x64xf32> to vector<8x8xf32>
    %265 = vector.broadcast %263 : vector<8x1xf32> to vector<8x8xf32>
    %266 = arith.mulf %265, %264 : vector<8x8xf32>
    %267 = arith.addf %262, %266 : vector<8x8xf32>
    %268 = vector.extract_strided_slice %233 {offsets = [0, 7], sizes = [8, 1], strides = [1, 1]} : vector<8x8xf32> to vector<8x1xf32>
    %269 = vector.extract_strided_slice %147 {offsets = [0, 56], sizes = [8, 8], strides = [1, 1]} : vector<8x64xf32> to vector<8x8xf32>
    %270 = vector.broadcast %268 : vector<8x1xf32> to vector<8x8xf32>
    %271 = arith.mulf %270, %269 : vector<8x8xf32>
    %272 = arith.addf %267, %271 : vector<8x8xf32>
    %c0_21 = arith.constant 0 : index
    %c56 = arith.constant 56 : index
    %273 = vector.load %arg8[%c0_21, %c56] : memref<8x72xf32, #tpu.memory_space<vmem>>, vector<8x8xf32>
    tpu.vector_store %arg8[%c0_21, %c56], %272 {strides = array<i32>} : memref<8x72xf32, #tpu.memory_space<vmem>>, vector<8x8xf32>,
    %c0_22 = arith.constant 0 : index
    %c0_23 = arith.constant 0 : index
    %274 = vector.load %arg6[%c0_22, %c0_23] : memref<64x16xf32, #tpu.memory_space<vmem>>, vector<64x16xf32>
    %c0_24 = arith.constant 0 : index
    %c0_25 = arith.constant 0 : index
    %275 = vector.load %arg7[%c0_24, %c0_25] : memref<8x64xf32, #tpu.memory_space<vmem>>, vector<8x64xf32>
    %cst_26 = arith.constant dense<0.000000e+00> : vector<8x16xf32>
    %276 = tpu.matmul %0, %274, %cst_26 {dimension_numbers = #tpu.dot_dimension_numbers<[1], [0], [0], [1], [0, 0, 1, 1], [], []>} : vector<8x64xf32>, vector<64x16xf32>, vector<8x16xf32> -> vector<8x16xf32>
    %277 = vector.extract_strided_slice %276 {offsets = [0, 0], sizes = [8, 8], strides = [1, 1]} : vector<8x16xf32> to vector<8x8xf32>
    %278 = vector.extract_strided_slice %276 {offsets = [0, 8], sizes = [8, 8], strides = [1, 1]} : vector<8x16xf32> to vector<8x8xf32>
    %279 = arith.mulf %277, %277 : vector<8x8xf32>
    %280 = arith.mulf %278, %278 : vector<8x8xf32>
    %281 = arith.addf %279, %280 : vector<8x8xf32>
    %282 = math.sqrt %281 : vector<8x8xf32>
    %cst_27 = arith.constant dense<0.000000e+00> : vector<8x64xf32>
    %283 = tpu.matmul %282, %275, %cst_27 {dimension_numbers = #tpu.dot_dimension_numbers<[1], [0], [0], [1], [0, 0, 1, 1], [], []>} : vector<8x8xf32>, vector<8x64xf32>, vector<8x64xf32> -> vector<8x64xf32>
    %284 = vector.extract_strided_slice %1 {offsets = [6, 0, 0], sizes = [1, 8, 8], strides = [1, 1, 1]} : vector<9x8x8xf32> to vector<1x8x8xf32>
    %285 = vector.shape_cast %284 : vector<1x8x8xf32> to vector<8x8xf32>
    %286 = vector.extract_strided_slice %285 {offsets = [0, 0], sizes = [8, 1], strides = [1, 1]} : vector<8x8xf32> to vector<8x1xf32>
    %287 = vector.extract_strided_slice %283 {offsets = [0, 0], sizes = [8, 8], strides = [1, 1]} : vector<8x64xf32> to vector<8x8xf32>
    %288 = vector.broadcast %286 : vector<8x1xf32> to vector<8x8xf32>
    %289 = arith.mulf %288, %287 : vector<8x8xf32>
    %290 = vector.extract_strided_slice %285 {offsets = [0, 1], sizes = [8, 1], strides = [1, 1]} : vector<8x8xf32> to vector<8x1xf32>
    %291 = vector.extract_strided_slice %283 {offsets = [0, 8], sizes = [8, 8], strides = [1, 1]} : vector<8x64xf32> to vector<8x8xf32>
    %292 = vector.broadcast %290 : vector<8x1xf32> to vector<8x8xf32>
    %293 = arith.mulf %292, %291 : vector<8x8xf32>
    %294 = arith.addf %289, %293 : vector<8x8xf32>
    %295 = vector.extract_strided_slice %285 {offsets = [0, 2], sizes = [8, 1], strides = [1, 1]} : vector<8x8xf32> to vector<8x1xf32>
    %296 = vector.extract_strided_slice %283 {offsets = [0, 16], sizes = [8, 8], strides = [1, 1]} : vector<8x64xf32> to vector<8x8xf32>
    %297 = vector.broadcast %295 : vector<8x1xf32> to vector<8x8xf32>
    %298 = arith.mulf %297, %296 : vector<8x8xf32>
    %299 = arith.addf %294, %298 : vector<8x8xf32>
    %300 = vector.extract_strided_slice %285 {offsets = [0, 3], sizes = [8, 1], strides = [1, 1]} : vector<8x8xf32> to vector<8x1xf32>
    %301 = vector.extract_strided_slice %283 {offsets = [0, 24], sizes = [8, 8], strides = [1, 1]} : vector<8x64xf32> to vector<8x8xf32>
    %302 = vector.broadcast %300 : vector<8x1xf32> to vector<8x8xf32>
    %303 = arith.mulf %302, %301 : vector<8x8xf32>
    %304 = arith.addf %299, %303 : vector<8x8xf32>
    %305 = vector.extract_strided_slice %285 {offsets = [0, 4], sizes = [8, 1], strides = [1, 1]} : vector<8x8xf32> to vector<8x1xf32>
    %306 = vector.extract_strided_slice %283 {offsets = [0, 32], sizes = [8, 8], strides = [1, 1]} : vector<8x64xf32> to vector<8x8xf32>
    %307 = vector.broadcast %305 : vector<8x1xf32> to vector<8x8xf32>
    %308 = arith.mulf %307, %306 : vector<8x8xf32>
    %309 = arith.addf %304, %308 : vector<8x8xf32>
    %310 = vector.extract_strided_slice %285 {offsets = [0, 5], sizes = [8, 1], strides = [1, 1]} : vector<8x8xf32> to vector<8x1xf32>
    %311 = vector.extract_strided_slice %283 {offsets = [0, 40], sizes = [8, 8], strides = [1, 1]} : vector<8x64xf32> to vector<8x8xf32>
    %312 = vector.broadcast %310 : vector<8x1xf32> to vector<8x8xf32>
    %313 = arith.mulf %312, %311 : vector<8x8xf32>
    %314 = arith.addf %309, %313 : vector<8x8xf32>
    %315 = vector.extract_strided_slice %285 {offsets = [0, 6], sizes = [8, 1], strides = [1, 1]} : vector<8x8xf32> to vector<8x1xf32>
    %316 = vector.extract_strided_slice %283 {offsets = [0, 48], sizes = [8, 8], strides = [1, 1]} : vector<8x64xf32> to vector<8x8xf32>
    %317 = vector.broadcast %315 : vector<8x1xf32> to vector<8x8xf32>
    %318 = arith.mulf %317, %316 : vector<8x8xf32>
    %319 = arith.addf %314, %318 : vector<8x8xf32>
    %320 = vector.extract_strided_slice %285 {offsets = [0, 7], sizes = [8, 1], strides = [1, 1]} : vector<8x8xf32> to vector<8x1xf32>
    %321 = vector.extract_strided_slice %283 {offsets = [0, 56], sizes = [8, 8], strides = [1, 1]} : vector<8x64xf32> to vector<8x8xf32>
    %322 = vector.broadcast %320 : vector<8x1xf32> to vector<8x8xf32>
    %323 = arith.mulf %322, %321 : vector<8x8xf32>
    %324 = arith.addf %319, %323 : vector<8x8xf32>
    %c0_28 = arith.constant 0 : index
    %c16 = arith.constant 16 : index
    %325 = vector.load %arg8[%c0_28, %c16] : memref<8x72xf32, #tpu.memory_space<vmem>>, vector<8x8xf32>
    tpu.vector_store %arg8[%c0_28, %c16], %324 {strides = array<i32>} : memref<8x72xf32, #tpu.memory_space<vmem>>, vector<8x8xf32>,
    %326 = vector.extract_strided_slice %1 {offsets = [7, 0, 0], sizes = [1, 8, 8], strides = [1, 1, 1]} : vector<9x8x8xf32> to vector<1x8x8xf32>
    %327 = vector.shape_cast %326 : vector<1x8x8xf32> to vector<8x8xf32>
    %328 = vector.extract_strided_slice %327 {offsets = [0, 0], sizes = [8, 1], strides = [1, 1]} : vector<8x8xf32> to vector<8x1xf32>
    %329 = vector.extract_strided_slice %283 {offsets = [0, 0], sizes = [8, 8], strides = [1, 1]} : vector<8x64xf32> to vector<8x8xf32>
    %330 = vector.broadcast %328 : vector<8x1xf32> to vector<8x8xf32>
    %331 = arith.mulf %330, %329 : vector<8x8xf32>
    %332 = vector.extract_strided_slice %327 {offsets = [0, 1], sizes = [8, 1], strides = [1, 1]} : vector<8x8xf32> to vector<8x1xf32>
    %333 = vector.extract_strided_slice %283 {offsets = [0, 8], sizes = [8, 8], strides = [1, 1]} : vector<8x64xf32> to vector<8x8xf32>
    %334 = vector.broadcast %332 : vector<8x1xf32> to vector<8x8xf32>
    %335 = arith.mulf %334, %333 : vector<8x8xf32>
    %336 = arith.addf %331, %335 : vector<8x8xf32>
    %337 = vector.extract_strided_slice %327 {offsets = [0, 2], sizes = [8, 1], strides = [1, 1]} : vector<8x8xf32> to vector<8x1xf32>
    %338 = vector.extract_strided_slice %283 {offsets = [0, 16], sizes = [8, 8], strides = [1, 1]} : vector<8x64xf32> to vector<8x8xf32>
    %339 = vector.broadcast %337 : vector<8x1xf32> to vector<8x8xf32>
    %340 = arith.mulf %339, %338 : vector<8x8xf32>
    %341 = arith.addf %336, %340 : vector<8x8xf32>
    %342 = vector.extract_strided_slice %327 {offsets = [0, 3], sizes = [8, 1], strides = [1, 1]} : vector<8x8xf32> to vector<8x1xf32>
    %343 = vector.extract_strided_slice %283 {offsets = [0, 24], sizes = [8, 8], strides = [1, 1]} : vector<8x64xf32> to vector<8x8xf32>
    %344 = vector.broadcast %342 : vector<8x1xf32> to vector<8x8xf32>
    %345 = arith.mulf %344, %343 : vector<8x8xf32>
    %346 = arith.addf %341, %345 : vector<8x8xf32>
    %347 = vector.extract_strided_slice %327 {offsets = [0, 4], sizes = [8, 1], strides = [1, 1]} : vector<8x8xf32> to vector<8x1xf32>
    %348 = vector.extract_strided_slice %283 {offsets = [0, 32], sizes = [8, 8], strides = [1, 1]} : vector<8x64xf32> to vector<8x8xf32>
    %349 = vector.broadcast %347 : vector<8x1xf32> to vector<8x8xf32>
    %350 = arith.mulf %349, %348 : vector<8x8xf32>
    %351 = arith.addf %346, %350 : vector<8x8xf32>
    %352 = vector.extract_strided_slice %327 {offsets = [0, 5], sizes = [8, 1], strides = [1, 1]} : vector<8x8xf32> to vector<8x1xf32>
    %353 = vector.extract_strided_slice %283 {offsets = [0, 40], sizes = [8, 8], strides = [1, 1]} : vector<8x64xf32> to vector<8x8xf32>
    %354 = vector.broadcast %352 : vector<8x1xf32> to vector<8x8xf32>
    %355 = arith.mulf %354, %353 : vector<8x8xf32>
    %356 = arith.addf %351, %355 : vector<8x8xf32>
    %357 = vector.extract_strided_slice %327 {offsets = [0, 6], sizes = [8, 1], strides = [1, 1]} : vector<8x8xf32> to vector<8x1xf32>
    %358 = vector.extract_strided_slice %283 {offsets = [0, 48], sizes = [8, 8], strides = [1, 1]} : vector<8x64xf32> to vector<8x8xf32>
    %359 = vector.broadcast %357 : vector<8x1xf32> to vector<8x8xf32>
    %360 = arith.mulf %359, %358 : vector<8x8xf32>
    %361 = arith.addf %356, %360 : vector<8x8xf32>
    %362 = vector.extract_strided_slice %327 {offsets = [0, 7], sizes = [8, 1], strides = [1, 1]} : vector<8x8xf32> to vector<8x1xf32>
    %363 = vector.extract_strided_slice %283 {offsets = [0, 56], sizes = [8, 8], strides = [1, 1]} : vector<8x64xf32> to vector<8x8xf32>
    %364 = vector.broadcast %362 : vector<8x1xf32> to vector<8x8xf32>
    %365 = arith.mulf %364, %363 : vector<8x8xf32>
    %366 = arith.addf %361, %365 : vector<8x8xf32>
    %c0_29 = arith.constant 0 : index
    %c40 = arith.constant 40 : index
    %367 = vector.load %arg8[%c0_29, %c40] : memref<8x72xf32, #tpu.memory_space<vmem>>, vector<8x8xf32>
    tpu.vector_store %arg8[%c0_29, %c40], %366 {strides = array<i32>} : memref<8x72xf32, #tpu.memory_space<vmem>>, vector<8x8xf32>,
    %368 = vector.extract_strided_slice %1 {offsets = [8, 0, 0], sizes = [1, 8, 8], strides = [1, 1, 1]} : vector<9x8x8xf32> to vector<1x8x8xf32>
    %369 = vector.shape_cast %368 : vector<1x8x8xf32> to vector<8x8xf32>
    %370 = vector.extract_strided_slice %369 {offsets = [0, 0], sizes = [8, 1], strides = [1, 1]} : vector<8x8xf32> to vector<8x1xf32>
    %371 = vector.extract_strided_slice %283 {offsets = [0, 0], sizes = [8, 8], strides = [1, 1]} : vector<8x64xf32> to vector<8x8xf32>
    %372 = vector.broadcast %370 : vector<8x1xf32> to vector<8x8xf32>
    %373 = arith.mulf %372, %371 : vector<8x8xf32>
    %374 = vector.extract_strided_slice %369 {offsets = [0, 1], sizes = [8, 1], strides = [1, 1]} : vector<8x8xf32> to vector<8x1xf32>
    %375 = vector.extract_strided_slice %283 {offsets = [0, 8], sizes = [8, 8], strides = [1, 1]} : vector<8x64xf32> to vector<8x8xf32>
    %376 = vector.broadcast %374 : vector<8x1xf32> to vector<8x8xf32>
    %377 = arith.mulf %376, %375 : vector<8x8xf32>
    %378 = arith.addf %373, %377 : vector<8x8xf32>
    %379 = vector.extract_strided_slice %369 {offsets = [0, 2], sizes = [8, 1], strides = [1, 1]} : vector<8x8xf32> to vector<8x1xf32>
    %380 = vector.extract_strided_slice %283 {offsets = [0, 16], sizes = [8, 8], strides = [1, 1]} : vector<8x64xf32> to vector<8x8xf32>
    %381 = vector.broadcast %379 : vector<8x1xf32> to vector<8x8xf32>
    %382 = arith.mulf %381, %380 : vector<8x8xf32>
    %383 = arith.addf %378, %382 : vector<8x8xf32>
    %384 = vector.extract_strided_slice %369 {offsets = [0, 3], sizes = [8, 1], strides = [1, 1]} : vector<8x8xf32> to vector<8x1xf32>
    %385 = vector.extract_strided_slice %283 {offsets = [0, 24], sizes = [8, 8], strides = [1, 1]} : vector<8x64xf32> to vector<8x8xf32>
    %386 = vector.broadcast %384 : vector<8x1xf32> to vector<8x8xf32>
    %387 = arith.mulf %386, %385 : vector<8x8xf32>
    %388 = arith.addf %383, %387 : vector<8x8xf32>
    %389 = vector.extract_strided_slice %369 {offsets = [0, 4], sizes = [8, 1], strides = [1, 1]} : vector<8x8xf32> to vector<8x1xf32>
    %390 = vector.extract_strided_slice %283 {offsets = [0, 32], sizes = [8, 8], strides = [1, 1]} : vector<8x64xf32> to vector<8x8xf32>
    %391 = vector.broadcast %389 : vector<8x1xf32> to vector<8x8xf32>
    %392 = arith.mulf %391, %390 : vector<8x8xf32>
    %393 = arith.addf %388, %392 : vector<8x8xf32>
    %394 = vector.extract_strided_slice %369 {offsets = [0, 5], sizes = [8, 1], strides = [1, 1]} : vector<8x8xf32> to vector<8x1xf32>
    %395 = vector.extract_strided_slice %283 {offsets = [0, 40], sizes = [8, 8], strides = [1, 1]} : vector<8x64xf32> to vector<8x8xf32>
    %396 = vector.broadcast %394 : vector<8x1xf32> to vector<8x8xf32>
    %397 = arith.mulf %396, %395 : vector<8x8xf32>
    %398 = arith.addf %393, %397 : vector<8x8xf32>
    %399 = vector.extract_strided_slice %369 {offsets = [0, 6], sizes = [8, 1], strides = [1, 1]} : vector<8x8xf32> to vector<8x1xf32>
    %400 = vector.extract_strided_slice %283 {offsets = [0, 48], sizes = [8, 8], strides = [1, 1]} : vector<8x64xf32> to vector<8x8xf32>
    %401 = vector.broadcast %399 : vector<8x1xf32> to vector<8x8xf32>
    %402 = arith.mulf %401, %400 : vector<8x8xf32>
    %403 = arith.addf %398, %402 : vector<8x8xf32>
    %404 = vector.extract_strided_slice %369 {offsets = [0, 7], sizes = [8, 1], strides = [1, 1]} : vector<8x8xf32> to vector<8x1xf32>
    %405 = vector.extract_strided_slice %283 {offsets = [0, 56], sizes = [8, 8], strides = [1, 1]} : vector<8x64xf32> to vector<8x8xf32>
    %406 = vector.broadcast %404 : vector<8x1xf32> to vector<8x8xf32>
    %407 = arith.mulf %406, %405 : vector<8x8xf32>
    %408 = arith.addf %403, %407 : vector<8x8xf32>
    %c0_30 = arith.constant 0 : index
    %c64 = arith.constant 64 : index
    %409 = vector.load %arg8[%c0_30, %c64] : memref<8x72xf32, #tpu.memory_space<vmem>>, vector<8x8xf32>
    tpu.vector_store %arg8[%c0_30, %c64], %408 {strides = array<i32>} : memref<8x72xf32, #tpu.memory_space<vmem>>, vector<8x8xf32>,
    return
  }
}

</mosaic_0001>

<llo_original>
// kernel: murenn_direct_forward.1
$region0: #{murenn_direct_forward.1}
  #allocation0 [shape = 'u32[]', space=smem, size = 0x4, offset = 0x4, fixed_abs, tag = 'smem constant byte address 0x4 - core index']
  #allocation1 [shape = 'u32[72,128]{1,0:T(1,128)}', space=vmem, size = 0x9000, scoped, tag = 'internal scratch']
  %s0 = inlined_call_operand.hbm [shape: f32[8,64], index: 0, kind: input, shape index: {}]
  %s1 = inlined_call_operand.vmem [shape: f32[9,8,8], index: 1, kind: input, shape index: {}]
  %s2 = inlined_call_operand.hbm [shape: f32[64,64], index: 2, kind: input, shape index: {}]
  %s3 = inlined_call_operand.vmem [shape: f32[32,64], index: 3, kind: input, shape index: {}]
  %s4 = inlined_call_operand.hbm [shape: f32[64,32], index: 4, kind: input, shape index: {}]
  %s5 = inlined_call_operand.vmem [shape: f32[16,64], index: 5, kind: input, shape index: {}]
  %s6 = inlined_call_operand.vmem [shape: f32[64,16], index: 6, kind: input, shape index: {}]
  %s7 = inlined_call_operand.hbm [shape: f32[8,64], index: 7, kind: input, shape index: {}]
  %s8 = inlined_call_operand.vmem [shape: f32[8,72], index: 8, kind: output, shape index: {}]
  %s9 = sld [smem:[#allocation0]]
  $region58: #{murenn_direct_forward.1} parent=0
    _
  %s11 = ssub.s32 1, %s9
  %s12 = scalar_select 0, %s11, %s9
  $region1: #{murenn_direct_forward.1} parent=0
    #allocation2 [shape = 'u8[4096]{0}', space=vmem, size = 0x1000, scoped, tag = 'input window, operand 0, single buffered']
    #allocation3 [shape = 's32[1]{0}', space=sflag, size = 0x4, scoped, tag = 'scoped memory for murenn_direct_forward.1']
    #allocation4 [shape = 'u8[32768]{0}', space=vmem, size = 0x8000, scoped, tag = 'input window, operand 2, single buffered']
    #allocation5 [shape = 's32[1]{0}', space=sflag, size = 0x4, scoped, tag = 'scoped memory for murenn_direct_forward.1']
    #allocation6 [shape = 'u8[32768]{0}', space=vmem, size = 0x8000, scoped, tag = 'input window, operand 4, single buffered']
    #allocation7 [shape = 'u8[4096]{0}', space=vmem, size = 0x1000, scoped, tag = 'input window, operand 7, single buffered']
    #allocation8 [shape = 's32[1]{0}', space=sflag, size = 0x4, scoped, tag = 'scoped memory for murenn_direct_forward.1']
    %13 = vsyncpa [#allocation3], 0
    %14 = vsyncpa [#allocation5], 0
    %15 = vsyncpa [#allocation8], 0
    // Predicated region
    $region2: #{murenn_direct_forward.1} parent=1 // pred_check
      _
    $region3: #{murenn_direct_forward.1} parent=1 // pred_check_branch
      %17 = sbr.rel (0) target = $region5
    $region4: #{murenn_direct_forward.1} parent=1 // pred_region
      %19 = vsyncadd [#allocation3], 0
      %s21 = sshll.u32 %s0, 4
      %s22 = int_to_ptr.hbm [resolvable:$true] %s21
      %s23 = sshll.u32 [#allocation2], 4
      %s24 = int_to_ptr.vmem [resolvable:$true] %s23
      %26 = dma.hbm_to_vmem [thread:$0]  %s22, 128, %s24, [#allocation3]
    $region5: #{murenn_direct_forward.1} parent=1 // pred_fallthru
      _
    // Predicated region
    $region6: #{murenn_direct_forward.1} parent=1 // pred_check
      _
    $region7: #{murenn_direct_forward.1} parent=1 // pred_check_branch
      %28 = sbr.rel (0) target = $region9
    $region8: #{murenn_direct_forward.1} parent=1 // pred_region
      _
    $region9: #{murenn_direct_forward.1} parent=1 // pred_fallthru
      _
    // Predicated region
    $region10: #{murenn_direct_forward.1} parent=1 // pred_check
      _
    $region11: #{murenn_direct_forward.1} parent=1 // pred_check_branch
      %30 = sbr.rel (0) target = $region13
    $region12: #{murenn_direct_forward.1} parent=1 // pred_region
      %32 = vsyncadd [#allocation5], 0
      %s33 = sshll.u32 %s2, 4
      %s34 = int_to_ptr.hbm [resolvable:$true] %s33
      %s35 = sshll.u32 [#allocation4], 4
      %s36 = int_to_ptr.vmem [resolvable:$true] %s35
      %41 = dma.hbm_to_vmem [thread:$0]  %s34, 1024, %s36, [#allocation5], 128, 128, 8
    $region13: #{murenn_direct_forward.1} parent=1 // pred_fallthru
      _
    // Predicated region
    $region14: #{murenn_direct_forward.1} parent=1 // pred_check
      _
    $region15: #{murenn_direct_forward.1} parent=1 // pred_check_branch
      %43 = sbr.rel (0) target = $region17
    $region16: #{murenn_direct_forward.1} parent=1 // pred_region
      _
    $region17: #{murenn_direct_forward.1} parent=1 // pred_fallthru
      _
    // Predicated region
    $region18: #{murenn_direct_forward.1} parent=1 // pred_check
      _
    $region19: #{murenn_direct_forward.1} parent=1 // pred_check_branch
      %45 = sbr.rel (0) target = $region21
    $region20: #{murenn_direct_forward.1} parent=1 // pred_region
      %47 = vsyncadd [#allocation5], 0
      %s48 = sshll.u32 %s4, 4
      %s49 = int_to_ptr.hbm [resolvable:$true] %s48
      %s50 = sshll.u32 [#allocation6], 4
      %s51 = int_to_ptr.vmem [resolvable:$true] %s50
      %56 = dma.hbm_to_vmem [thread:$0]  %s49, 1024, %s51, [#allocation5], 128, 128, 8
    $region21: #{murenn_direct_forward.1} parent=1 // pred_fallthru
      _
    // Predicated region
    $region22: #{murenn_direct_forward.1} parent=1 // pred_check
      _
    $region23: #{murenn_direct_forward.1} parent=1 // pred_check_branch
      %58 = sbr.rel (0) target = $region25
    $region24: #{murenn_direct_forward.1} parent=1 // pred_region
      _
    $region25: #{murenn_direct_forward.1} parent=1 // pred_fallthru
      _
    // Predicated region
    $region26: #{murenn_direct_forward.1} parent=1 // pred_check
      _
    $region27: #{murenn_direct_forward.1} parent=1 // pred_check_branch
      %60 = sbr.rel (0) target = $region29
    $region28: #{murenn_direct_forward.1} parent=1 // pred_region
      _
    $region29: #{murenn_direct_forward.1} parent=1 // pred_fallthru
      _
    // Predicated region
    $region30: #{murenn_direct_forward.1} parent=1 // pred_check
      _
    $region31: #{murenn_direct_forward.1} parent=1 // pred_check_branch
      %62 = sbr.rel (0) target = $region33
    $region32: #{murenn_direct_forward.1} parent=1 // pred_region
      %64 = vsyncadd [#allocation8], 0
      %s66 = sshll.u32 %s7, 4
      %s67 = int_to_ptr.hbm [resolvable:$true] %s66
      %s68 = sshll.u32 [#allocation7], 4
      %s69 = int_to_ptr.vmem [resolvable:$true] %s68
      %71 = dma.hbm_to_vmem [thread:$0]  %s67, 128, %s69, [#allocation8]
    $region33: #{murenn_direct_forward.1} parent=1 // pred_fallthru
      _
    // Predicated region
    $region34: #{murenn_direct_forward.1} parent=1 // pred_check
      _
    $region35: #{murenn_direct_forward.1} parent=1 // pred_check_branch
      %73 = sbr.rel (0) target = $region37
    $region36: #{murenn_direct_forward.1} parent=1 // pred_region
      %75 = dma.done [#allocation3], 128
    $region37: #{murenn_direct_forward.1} parent=1 // pred_fallthru
      _
    // Predicated region
    $region38: #{murenn_direct_forward.1} parent=1 // pred_check
      _
    $region39: #{murenn_direct_forward.1} parent=1 // pred_check_branch
      %77 = sbr.rel (0) target = $region41
    $region40: #{murenn_direct_forward.1} parent=1 // pred_region
      %79 = dma.done [#allocation5], 1024
    $region41: #{murenn_direct_forward.1} parent=1 // pred_fallthru
      _
    // Predicated region
    $region42: #{murenn_direct_forward.1} parent=1 // pred_check
      _
    $region43: #{murenn_direct_forward.1} parent=1 // pred_check_branch
      %81 = sbr.rel (0) target = $region45
    $region44: #{murenn_direct_forward.1} parent=1 // pred_region
      %83 = dma.done [#allocation5], 1024
    $region45: #{murenn_direct_forward.1} parent=1 // pred_fallthru
      _
    // Predicated region
    $region46: #{murenn_direct_forward.1} parent=1 // pred_check
      _
    $region47: #{murenn_direct_forward.1} parent=1 // pred_check_branch
      %85 = sbr.rel (0) target = $region49
    $region48: #{murenn_direct_forward.1} parent=1 // pred_region
      %87 = dma.done [#allocation8], 128
    $region49: #{murenn_direct_forward.1} parent=1 // pred_fallthru
      _
    %v88 = vld [vmem:[#allocation2] sm:$0xff]
    %v89 = vld [vmem:[%s1] sm:$0xff]
    %v90 = vld [vmem:[%s1 + $0x8] sm:$0xff]
    %v91 = vld [vmem:[%s1 + $0x10] sm:$0xff]
    %v92 = vld [vmem:[%s1 + $0x18] sm:$0xff]
    %v93 = vld [vmem:[%s1 + $0x20] sm:$0xff]
    %v94 = vld [vmem:[%s1 + $0x28] sm:$0xff]
    %v95 = vld [vmem:[%s1 + $0x30] sm:$0xff]
    %v96 = vld [vmem:[%s1 + $0x38] sm:$0xff]
    %v97 = vld [vmem:[%s1 + $0x40] sm:$0xff]
    %v98 = vld [vmem:[#allocation4] sm:$0xff]
    %v99 = vld [vmem:[#allocation4 + $0x8] sm:$0xff]
    %v100 = vld [vmem:[#allocation4 + $0x10] sm:$0xff]
    %v101 = vld [vmem:[#allocation4 + $0x18] sm:$0xff]
    %v102 = vld [vmem:[#allocation4 + $0x20] sm:$0xff]
    %v103 = vld [vmem:[#allocation4 + $0x28] sm:$0xff]
    %v104 = vld [vmem:[#allocation4 + $0x30] sm:$0xff]
    %v105 = vld [vmem:[#allocation4 + $0x38] sm:$0xff]
    %v106 = vld [vmem:[%s3] sm:$0xff]
    %v107 = vld [vmem:[%s3 + $0x8] sm:$0xff]
    %v108 = vld [vmem:[%s3 + $0x10] sm:$0xff]
    %v109 = vld [vmem:[%s3 + $0x18] sm:$0xff]
    %vm110 = vcmask 523264
    %v112 = vsel %vm110, %v88, 0
    %114 = vmatpush.msra.mxu0 0.0
    %115 = vmatpush.msra.mxu0 0.0
    %116 = vmatpush.msra.mxu0 0.0
    %117 = vmatpush.msra.mxu0 0.0
    %118 = vmatpush.msra.mxu0 0.0
    %119 = vmatpush.msra.mxu0 0.0
    %120 = vmatpush.msra.mxu0 0.0
    %121 = vmatpush.msra.mxu0 0.0
    %122 = vmatpush.msra.mxu0 %v105
    %123 = vmatpush.msra.mxu0 %v104
    %124 = vmatpush.msra.mxu0 %v103
    %125 = vmatpush.msra.mxu0 %v102
    %126 = vmatpush.msra.mxu0 %v101
    %127 = vmatpush.msra.mxu0 %v100
    %128 = vmatpush.msra.mxu0 %v99
    %129 = vmatpush.msra.mxu0 %v98
    %130 = vmatmul.f32.gmra.mxu0 %v112
    %v131 = vpop.f32.mrf.mxu0
    %v132 = vadd.f32 0.0, %v131
    %133 = vdwg.mxu0
    %v134 = vmul.f32 %v132, %v132
    %136 = vrot.lane.b32.xlu0 %v134, 96
    %v137 = vpop.permute.xlu0 %136
    %v139 = vadd.f32 %v134, %v137
    %v140 = vrsqrt.pop %v139
    %v141 = vmul.f32 %v140, %v139
    %v142 = vmul.f32 %v141, %v140
    %v143 = vmul.f32 0.5, %v142
    %v144 = vsub.f32 1.5, %v143
    %v145 = vmul.f32 %v140, %v144
    %v146 = vmul.f32 %v139, %v145
    %vm147 = vcmp.eq.f32.partialorder %v139, inf
    %v148 = vsel %vm147, %v139, %v146
    %vm149 = vcmp.eq.f32.partialorder %v139, 0.0
    %v150 = vand.u32 %v139, 2147483648
    %v151 = vsel %vm149, %v150, %v148
    %vm152 = vcmask 261120
    %v154 = vsel %vm152, %v151, 0
    %156 = vmatpush.msra.mxu0 0.0
    %157 = vmatpush.msra.mxu0 0.0
    %158 = vmatpush.msra.mxu0 0.0
    %159 = vmatpush.msra.mxu0 0.0
    %160 = vmatpush.msra.mxu0 0.0
    %161 = vmatpush.msra.mxu0 0.0
    %162 = vmatpush.msra.mxu0 0.0
    %163 = vmatpush.msra.mxu0 0.0
    %164 = vmatpush.msra.mxu0 0.0
    %165 = vmatpush.msra.mxu0 0.0
    %166 = vmatpush.msra.mxu0 0.0
    %167 = vmatpush.msra.mxu0 0.0
    %168 = vmatpush.msra.mxu0 %v109
    %169 = vmatpush.msra.mxu0 %v108
    %170 = vmatpush.msra.mxu0 %v107
    %171 = vmatpush.msra.mxu0 %v106
    %172 = vmatmul.f32.gmra.mxu0 %v154
    %v173 = vpop.f32.mrf.mxu0
    %v174 = vadd.f32 0.0, %v173
    %175 = vdwg.mxu0
    %177 = vset.pattern.permute.xlu0 0
    %178 = vperm.xlu0 %177, %v89
    %v179 = vpop.permute.xlu0 %178
    %v181 = vmul.f32 %v179, %v174
    %182 = vset.pattern.permute.xlu0 1
    %183 = vperm.xlu0 %182, %v89
    %v184 = vpop.permute.xlu0 %183
    %v186 = vmul.f32 %v184, %v174
    %188 = vrot.lane.b32.xlu0 %v186, 120
    %v189 = vpop.permute.xlu0 %188
    %v191 = vadd.f32 %v181, %v189
    %192 = vset.pattern.permute.xlu0 2
    %193 = vperm.xlu0 %192, %v89
    %v194 = vpop.permute.xlu0 %193
    %v196 = vmul.f32 %v194, %v174
    %198 = vrot.lane.b32.xlu0 %v196, 112
    %v199 = vpop.permute.xlu0 %198
    %v201 = vadd.f32 %v191, %v199
    %202 = vset.pattern.permute.xlu0 3
    %203 = vperm.xlu0 %202, %v89
    %v204 = vpop.permute.xlu0 %203
    %v206 = vmul.f32 %v204, %v174
    %208 = vrot.lane.b32.xlu0 %v206, 104
    %v209 = vpop.permute.xlu0 %208
    %v211 = vadd.f32 %v201, %v209
    %212 = vset.pattern.permute.xlu0 4
    %213 = vperm.xlu0 %212, %v89
    %v214 = vpop.permute.xlu0 %213
    %v216 = vmul.f32 %v214, %v174
    %218 = vrot.lane.b32.xlu0 %v216, 96
    %v219 = vpop.permute.xlu0 %218
    %v221 = vadd.f32 %v211, %v219
    %222 = vset.pattern.permute.xlu0 5
    %223 = vperm.xlu0 %222, %v89
    %v224 = vpop.permute.xlu0 %223
    %v226 = vmul.f32 %v224, %v174
    %228 = vrot.lane.b32.xlu0 %v226, 88
    %v229 = vpop.permute.xlu0 %228
    %v231 = vadd.f32 %v221, %v229
    %232 = vset.pattern.permute.xlu0 6
    %233 = vperm.xlu0 %232, %v89
    %v234 = vpop.permute.xlu0 %233
    %v236 = vmul.f32 %v234, %v174
    %238 = vrot.lane.b32.xlu0 %v236, 80
    %v239 = vpop.permute.xlu0 %238
    %v241 = vadd.f32 %v231, %v239
    %242 = vset.pattern.permute.xlu0 7
    %243 = vperm.xlu0 %242, %v89
    %v244 = vpop.permute.xlu0 %243
    %v246 = vmul.f32 %v244, %v174
    %248 = vrot.lane.b32.xlu0 %v246, 72
    %v249 = vpop.permute.xlu0 %248
    %v251 = vadd.f32 %v241, %v249
    %vm252 = vcmask 64512
    %253 = vst.msk [vmem:[%s8] sm:$0xff] %vm252, %v251
    %255 = vset.pattern.permute.xlu0 0
    %256 = vperm.xlu0 %255, %v90
    %v257 = vpop.permute.xlu0 %256
    %v259 = vmul.f32 %v257, %v174
    %260 = vset.pattern.permute.xlu0 1
    %261 = vperm.xlu0 %260, %v90
    %v262 = vpop.permute.xlu0 %261
    %v264 = vmul.f32 %v262, %v174
    %266 = vrot.lane.b32.xlu0 %v264, 120
    %v267 = vpop.permute.xlu0 %266
    %v269 = vadd.f32 %v259, %v267
    %270 = vset.pattern.permute.xlu0 2
    %271 = vperm.xlu0 %270, %v90
    %v272 = vpop.permute.xlu0 %271
    %v274 = vmul.f32 %v272, %v174
    %276 = vrot.lane.b32.xlu0 %v274, 112
    %v277 = vpop.permute.xlu0 %276
    %v279 = vadd.f32 %v269, %v277
    %280 = vset.pattern.permute.xlu0 3
    %281 = vperm.xlu0 %280, %v90
    %v282 = vpop.permute.xlu0 %281
    %v284 = vmul.f32 %v282, %v174
    %286 = vrot.lane.b32.xlu0 %v284, 104
    %v287 = vpop.permute.xlu0 %286
    %v289 = vadd.f32 %v279, %v287
    %290 = vset.pattern.permute.xlu0 4
    %291 = vperm.xlu0 %290, %v90
    %v292 = vpop.permute.xlu0 %291
    %v294 = vmul.f32 %v292, %v174
    %296 = vrot.lane.b32.xlu0 %v294, 96
    %v297 = vpop.permute.xlu0 %296
    %v299 = vadd.f32 %v289, %v297
    %300 = vset.pattern.permute.xlu0 5
    %301 = vperm.xlu0 %300, %v90
    %v302 = vpop.permute.xlu0 %301
    %v304 = vmul.f32 %v302, %v174
    %306 = vrot.lane.b32.xlu0 %v304, 88
    %v307 = vpop.permute.xlu0 %306
    %v309 = vadd.f32 %v299, %v307
    %310 = vset.pattern.permute.xlu0 6
    %311 = vperm.xlu0 %310, %v90
    %v312 = vpop.permute.xlu0 %311
    %v314 = vmul.f32 %v312, %v174
    %316 = vrot.lane.b32.xlu0 %v314, 80
    %v317 = vpop.permute.xlu0 %316
    %v319 = vadd.f32 %v309, %v317
    %320 = vset.pattern.permute.xlu0 7
    %321 = vperm.xlu0 %320, %v90
    %v322 = vpop.permute.xlu0 %321
    %v324 = vmul.f32 %v322, %v174
    %326 = vrot.lane.b32.xlu0 %v324, 72
    %v327 = vpop.permute.xlu0 %326
    %v329 = vadd.f32 %v319, %v327
    %331 = vrot.lane.b32.xlu0 %v329, 24
    %v332 = vpop.permute.xlu0 %331
    %vm334 = vcmask 261312
    %335 = vst.msk [vmem:[%s8] sm:$0xff] %vm334, %v332
    %337 = vset.pattern.permute.xlu0 0
    %338 = vperm.xlu0 %337, %v91
    %v339 = vpop.permute.xlu0 %338
    %v341 = vmul.f32 %v339, %v174
    %342 = vset.pattern.permute.xlu0 1
    %343 = vperm.xlu0 %342, %v91
    %v344 = vpop.permute.xlu0 %343
    %v346 = vmul.f32 %v344, %v174
    %348 = vrot.lane.b32.xlu0 %v346, 120
    %v349 = vpop.permute.xlu0 %348
    %v351 = vadd.f32 %v341, %v349
    %352 = vset.pattern.permute.xlu0 2
    %353 = vperm.xlu0 %352, %v91
    %v354 = vpop.permute.xlu0 %353
    %v356 = vmul.f32 %v354, %v174
    %358 = vrot.lane.b32.xlu0 %v356, 112
    %v359 = vpop.permute.xlu0 %358
    %v361 = vadd.f32 %v351, %v359
    %362 = vset.pattern.permute.xlu0 3
    %363 = vperm.xlu0 %362, %v91
    %v364 = vpop.permute.xlu0 %363
    %v366 = vmul.f32 %v364, %v174
    %368 = vrot.lane.b32.xlu0 %v366, 104
    %v369 = vpop.permute.xlu0 %368
    %v371 = vadd.f32 %v361, %v369
    %372 = vset.pattern.permute.xlu0 4
    %373 = vperm.xlu0 %372, %v91
    %v374 = vpop.permute.xlu0 %373
    %v376 = vmul.f32 %v374, %v174
    %378 = vrot.lane.b32.xlu0 %v376, 96
    %v379 = vpop.permute.xlu0 %378
    %v381 = vadd.f32 %v371, %v379
    %382 = vset.pattern.permute.xlu0 5
    %383 = vperm.xlu0 %382, %v91
    %v384 = vpop.permute.xlu0 %383
    %v386 = vmul.f32 %v384, %v174
    %388 = vrot.lane.b32.xlu0 %v386, 88
    %v389 = vpop.permute.xlu0 %388
    %v391 = vadd.f32 %v381, %v389
    %392 = vset.pattern.permute.xlu0 6
    %393 = vperm.xlu0 %392, %v91
    %v394 = vpop.permute.xlu0 %393
    %v396 = vmul.f32 %v394, %v174
    %398 = vrot.lane.b32.xlu0 %v396, 80
    %v399 = vpop.permute.xlu0 %398
    %v401 = vadd.f32 %v391, %v399
    %402 = vset.pattern.permute.xlu0 7
    %403 = vperm.xlu0 %402, %v91
    %v404 = vpop.permute.xlu0 %403
    %v406 = vmul.f32 %v404, %v174
    %408 = vrot.lane.b32.xlu0 %v406, 72
    %v409 = vpop.permute.xlu0 %408
    %v411 = vadd.f32 %v401, %v409
    %413 = vrot.lane.b32.xlu0 %v411, 48
    %v414 = vpop.permute.xlu0 %413
    %vm416 = vcmask 458112
    %417 = vst.msk [vmem:[%s8] sm:$0xff] %vm416, %v414
    %v418 = vld [vmem:[#allocation6] sm:$0xff]
    %v419 = vld [vmem:[#allocation6 + $0x8] sm:$0xff]
    %v420 = vld [vmem:[#allocation6 + $0x10] sm:$0xff]
    %v421 = vld [vmem:[#allocation6 + $0x18] sm:$0xff]
    %v422 = vld [vmem:[#allocation6 + $0x20] sm:$0xff]
    %v423 = vld [vmem:[#allocation6 + $0x28] sm:$0xff]
    %v424 = vld [vmem:[#allocation6 + $0x30] sm:$0xff]
    %v425 = vld [vmem:[#allocation6 + $0x38] sm:$0xff]
    %v426 = vld [vmem:[%s5] sm:$0xff]
    %v427 = vld [vmem:[%s5 + $0x8] sm:$0xff]
    %428 = vmatpush.msra.mxu0 0.0
    %429 = vmatpush.msra.mxu0 0.0
    %430 = vmatpush.msra.mxu0 0.0
    %431 = vmatpush.msra.mxu0 0.0
    %432 = vmatpush.msra.mxu0 0.0
    %433 = vmatpush.msra.mxu0 0.0
    %434 = vmatpush.msra.mxu0 0.0
    %435 = vmatpush.msra.mxu0 0.0
    %436 = vmatpush.msra.mxu0 %v425
    %437 = vmatpush.msra.mxu0 %v424
    %438 = vmatpush.msra.mxu0 %v423
    %439 = vmatpush.msra.mxu0 %v422
    %440 = vmatpush.msra.mxu0 %v421
    %441 = vmatpush.msra.mxu0 %v420
    %442 = vmatpush.msra.mxu0 %v419
    %443 = vmatpush.msra.mxu0 %v418
    %444 = vmatmul.f32.gmra.mxu0 %v112
    %v445 = vpop.f32.mrf.mxu0
    %v446 = vadd.f32 0.0, %v445
    %447 = vdwg.mxu0
    %v448 = vmul.f32 %v446, %v446
    %450 = vrot.lane.b32.xlu0 %v448, 112
    %v451 = vpop.permute.xlu0 %450
    %v453 = vadd.f32 %v448, %v451
    %v454 = vrsqrt.pop %v453
    %v455 = vmul.f32 %v454, %v453
    %v456 = vmul.f32 %v455, %v454
    %v457 = vmul.f32 0.5, %v456
    %v458 = vsub.f32 1.5, %v457
    %v459 = vmul.f32 %v454, %v458
    %v460 = vmul.f32 %v453, %v459
    %vm461 = vcmp.eq.f32.partialorder %v453, inf
    %v462 = vsel %vm461, %v453, %v460
    %vm463 = vcmp.eq.f32.partialorder %v453, 0.0
    %v464 = vand.u32 %v453, 2147483648
    %v465 = vsel %vm463, %v464, %v462
    %vm466 = vcmask 130048
    %v468 = vsel %vm466, %v465, 0
    %470 = vmatpush.msra.mxu0 0.0
    %471 = vmatpush.msra.mxu0 0.0
    %472 = vmatpush.msra.mxu0 0.0
    %473 = vmatpush.msra.mxu0 0.0
    %474 = vmatpush.msra.mxu0 0.0
    %475 = vmatpush.msra.mxu0 0.0
    %476 = vmatpush.msra.mxu0 0.0
    %477 = vmatpush.msra.mxu0 0.0
    %478 = vmatpush.msra.mxu0 0.0
    %479 = vmatpush.msra.mxu0 0.0
    %480 = vmatpush.msra.mxu0 0.0
    %481 = vmatpush.msra.mxu0 0.0
    %482 = vmatpush.msra.mxu0 0.0
    %483 = vmatpush.msra.mxu0 0.0
    %484 = vmatpush.msra.mxu0 %v427
    %485 = vmatpush.msra.mxu0 %v426
    %486 = vmatmul.f32.gmra.mxu0 %v468
    %v487 = vpop.f32.mrf.mxu0
    %v488 = vadd.f32 0.0, %v487
    %489 = vdwg.mxu0
    %491 = vset.pattern.permute.xlu0 0
    %492 = vperm.xlu0 %491, %v92
    %v493 = vpop.permute.xlu0 %492
    %v495 = vmul.f32 %v493, %v488
    %496 = vset.pattern.permute.xlu0 1
    %497 = vperm.xlu0 %496, %v92
    %v498 = vpop.permute.xlu0 %497
    %v500 = vmul.f32 %v498, %v488
    %502 = vrot.lane.b32.xlu0 %v500, 120
    %v503 = vpop.permute.xlu0 %502
    %v505 = vadd.f32 %v495, %v503
    %506 = vset.pattern.permute.xlu0 2
    %507 = vperm.xlu0 %506, %v92
    %v508 = vpop.permute.xlu0 %507
    %v510 = vmul.f32 %v508, %v488
    %512 = vrot.lane.b32.xlu0 %v510, 112
    %v513 = vpop.permute.xlu0 %512
    %v515 = vadd.f32 %v505, %v513
    %516 = vset.pattern.permute.xlu0 3
    %517 = vperm.xlu0 %516, %v92
    %v518 = vpop.permute.xlu0 %517
    %v520 = vmul.f32 %v518, %v488
    %522 = vrot.lane.b32.xlu0 %v520, 104
    %v523 = vpop.permute.xlu0 %522
    %v525 = vadd.f32 %v515, %v523
    %526 = vset.pattern.permute.xlu0 4
    %527 = vperm.xlu0 %526, %v92
    %v528 = vpop.permute.xlu0 %527
    %v530 = vmul.f32 %v528, %v488
    %532 = vrot.lane.b32.xlu0 %v530, 96
    %v533 = vpop.permute.xlu0 %532
    %v535 = vadd.f32 %v525, %v533
    %536 = vset.pattern.permute.xlu0 5
    %537 = vperm.xlu0 %536, %v92
    %v538 = vpop.permute.xlu0 %537
    %v540 = vmul.f32 %v538, %v488
    %542 = vrot.lane.b32.xlu0 %v540, 88
    %v543 = vpop.permute.xlu0 %542
    %v545 = vadd.f32 %v535, %v543
    %546 = vset.pattern.permute.xlu0 6
    %547 = vperm.xlu0 %546, %v92
    %v548 = vpop.permute.xlu0 %547
    %v550 = vmul.f32 %v548, %v488
    %552 = vrot.lane.b32.xlu0 %v550, 80
    %v553 = vpop.permute.xlu0 %552
    %v555 = vadd.f32 %v545, %v553
    %556 = vset.pattern.permute.xlu0 7
    %557 = vperm.xlu0 %556, %v92
    %v558 = vpop.permute.xlu0 %557
    %v560 = vmul.f32 %v558, %v488
    %562 = vrot.lane.b32.xlu0 %v560, 72
    %v563 = vpop.permute.xlu0 %562
    %v565 = vadd.f32 %v555, %v563
    %567 = vrot.lane.b32.xlu0 %v565, 8
    %v568 = vpop.permute.xlu0 %567
    %vm570 = vcmask 130112
    %571 = vst.msk [vmem:[%s8] sm:$0xff] %vm570, %v568
    %573 = vset.pattern.permute.xlu0 0
    %574 = vperm.xlu0 %573, %v93
    %v575 = vpop.permute.xlu0 %574
    %v577 = vmul.f32 %v575, %v488
    %578 = vset.pattern.permute.xlu0 1
    %579 = vperm.xlu0 %578, %v93
    %v580 = vpop.permute.xlu0 %579
    %v582 = vmul.f32 %v580, %v488
    %584 = vrot.lane.b32.xlu0 %v582, 120
    %v585 = vpop.permute.xlu0 %584
    %v587 = vadd.f32 %v577, %v585
    %588 = vset.pattern.permute.xlu0 2
    %589 = vperm.xlu0 %588, %v93
    %v590 = vpop.permute.xlu0 %589
    %v592 = vmul.f32 %v590, %v488
    %594 = vrot.lane.b32.xlu0 %v592, 112
    %v595 = vpop.permute.xlu0 %594
    %v597 = vadd.f32 %v587, %v595
    %598 = vset.pattern.permute.xlu0 3
    %599 = vperm.xlu0 %598, %v93
    %v600 = vpop.permute.xlu0 %599
    %v602 = vmul.f32 %v600, %v488
    %604 = vrot.lane.b32.xlu0 %v602, 104
    %v605 = vpop.permute.xlu0 %604
    %v607 = vadd.f32 %v597, %v605
    %608 = vset.pattern.permute.xlu0 4
    %609 = vperm.xlu0 %608, %v93
    %v610 = vpop.permute.xlu0 %609
    %v612 = vmul.f32 %v610, %v488
    %614 = vrot.lane.b32.xlu0 %v612, 96
    %v615 = vpop.permute.xlu0 %614
    %v617 = vadd.f32 %v607, %v615
    %618 = vset.pattern.permute.xlu0 5
    %619 = vperm.xlu0 %618, %v93
    %v620 = vpop.permute.xlu0 %619
    %v622 = vmul.f32 %v620, %v488
    %624 = vrot.lane.b32.xlu0 %v622, 88
    %v625 = vpop.permute.xlu0 %624
    %v627 = vadd.f32 %v617, %v625
    %628 = vset.pattern.permute.xlu0 6
    %629 = vperm.xlu0 %628, %v93
    %v630 = vpop.permute.xlu0 %629
    %v632 = vmul.f32 %v630, %v488
    %634 = vrot.lane.b32.xlu0 %v632, 80
    %v635 = vpop.permute.xlu0 %634
    %v637 = vadd.f32 %v627, %v635
    %638 = vset.pattern.permute.xlu0 7
    %639 = vperm.xlu0 %638, %v93
    %v640 = vpop.permute.xlu0 %639
    %v642 = vmul.f32 %v640, %v488
    %644 = vrot.lane.b32.xlu0 %v642, 72
    %v645 = vpop.permute.xlu0 %644
    %v647 = vadd.f32 %v637, %v645
    %649 = vrot.lane.b32.xlu0 %v647, 32
    %v650 = vpop.permute.xlu0 %649
    %vm652 = vcmask 326912
    %653 = vst.msk [vmem:[%s8] sm:$0xff] %vm652, %v650
    %655 = vset.pattern.permute.xlu0 0
    %656 = vperm.xlu0 %655, %v94
    %v657 = vpop.permute.xlu0 %656
    %v659 = vmul.f32 %v657, %v488
    %660 = vset.pattern.permute.xlu0 1
    %661 = vperm.xlu0 %660, %v94
    %v662 = vpop.permute.xlu0 %661
    %v664 = vmul.f32 %v662, %v488
    %666 = vrot.lane.b32.xlu0 %v664, 120
    %v667 = vpop.permute.xlu0 %666
    %v669 = vadd.f32 %v659, %v667
    %670 = vset.pattern.permute.xlu0 2
    %671 = vperm.xlu0 %670, %v94
    %v672 = vpop.permute.xlu0 %671
    %v674 = vmul.f32 %v672, %v488
    %676 = vrot.lane.b32.xlu0 %v674, 112
    %v677 = vpop.permute.xlu0 %676
    %v679 = vadd.f32 %v669, %v677
    %680 = vset.pattern.permute.xlu0 3
    %681 = vperm.xlu0 %680, %v94
    %v682 = vpop.permute.xlu0 %681
    %v684 = vmul.f32 %v682, %v488
    %686 = vrot.lane.b32.xlu0 %v684, 104
    %v687 = vpop.permute.xlu0 %686
    %v689 = vadd.f32 %v679, %v687
    %690 = vset.pattern.permute.xlu0 4
    %691 = vperm.xlu0 %690, %v94
    %v692 = vpop.permute.xlu0 %691
    %v694 = vmul.f32 %v692, %v488
    %696 = vrot.lane.b32.xlu0 %v694, 96
    %v697 = vpop.permute.xlu0 %696
    %v699 = vadd.f32 %v689, %v697
    %700 = vset.pattern.permute.xlu0 5
    %701 = vperm.xlu0 %700, %v94
    %v702 = vpop.permute.xlu0 %701
    %v704 = vmul.f32 %v702, %v488
    %706 = vrot.lane.b32.xlu0 %v704, 88
    %v707 = vpop.permute.xlu0 %706
    %v709 = vadd.f32 %v699, %v707
    %710 = vset.pattern.permute.xlu0 6
    %711 = vperm.xlu0 %710, %v94
    %v712 = vpop.permute.xlu0 %711
    %v714 = vmul.f32 %v712, %v488
    %716 = vrot.lane.b32.xlu0 %v714, 80
    %v717 = vpop.permute.xlu0 %716
    %v719 = vadd.f32 %v709, %v717
    %720 = vset.pattern.permute.xlu0 7
    %721 = vperm.xlu0 %720, %v94
    %v722 = vpop.permute.xlu0 %721
    %v724 = vmul.f32 %v722, %v488
    %726 = vrot.lane.b32.xlu0 %v724, 72
    %v727 = vpop.permute.xlu0 %726
    %v729 = vadd.f32 %v719, %v727
    %731 = vrot.lane.b32.xlu0 %v729, 56
    %v732 = vpop.permute.xlu0 %731
    %vm734 = vcmask 523712
    %735 = vst.msk [vmem:[%s8] sm:$0xff] %vm734, %v732
    %v736 = vld [vmem:[%s6] sm:$0xff]
    %v737 = vld [vmem:[%s6 + $0x8] sm:$0xff]
    %v738 = vld [vmem:[%s6 + $0x10] sm:$0xff]
    %v739 = vld [vmem:[%s6 + $0x18] sm:$0xff]
    %v740 = vld [vmem:[%s6 + $0x20] sm:$0xff]
    %v741 = vld [vmem:[%s6 + $0x28] sm:$0xff]
    %v742 = vld [vmem:[%s6 + $0x30] sm:$0xff]
    %v743 = vld [vmem:[%s6 + $0x38] sm:$0xff]
    %v744 = vld [vmem:[#allocation7] sm:$0xff]
    %745 = vmatpush.msra.mxu0 0.0
    %746 = vmatpush.msra.mxu0 0.0
    %747 = vmatpush.msra.mxu0 0.0
    %748 = vmatpush.msra.mxu0 0.0
    %749 = vmatpush.msra.mxu0 0.0
    %750 = vmatpush.msra.mxu0 0.0
    %751 = vmatpush.msra.mxu0 0.0
    %752 = vmatpush.msra.mxu0 0.0
    %753 = vmatpush.msra.mxu0 %v743
    %754 = vmatpush.msra.mxu0 %v742
    %755 = vmatpush.msra.mxu0 %v741
    %756 = vmatpush.msra.mxu0 %v740
    %757 = vmatpush.msra.mxu0 %v739
    %758 = vmatpush.msra.mxu0 %v738
    %759 = vmatpush.msra.mxu0 %v737
    %760 = vmatpush.msra.mxu0 %v736
    %761 = vmatmul.f32.gmra.mxu0 %v112
    %v762 = vpop.f32.mrf.mxu0
    %v763 = vadd.f32 0.0, %v762
    %764 = vdwg.mxu0
    %v765 = vmul.f32 %v763, %v763
    %767 = vrot.lane.b32.xlu0 %v765, 120
    %v768 = vpop.permute.xlu0 %767
    %v770 = vadd.f32 %v765, %v768
    %v771 = vrsqrt.pop %v770
    %v772 = vmul.f32 %v771, %v770
    %v773 = vmul.f32 %v772, %v771
    %v774 = vmul.f32 0.5, %v773
    %v775 = vsub.f32 1.5, %v774
    %v776 = vmul.f32 %v771, %v775
    %v777 = vmul.f32 %v770, %v776
    %vm778 = vcmp.eq.f32.partialorder %v770, inf
    %v779 = vsel %vm778, %v770, %v777
    %vm780 = vcmp.eq.f32.partialorder %v770, 0.0
    %v781 = vand.u32 %v770, 2147483648
    %v782 = vsel %vm780, %v781, %v779
    %v784 = vsel %vm252, %v782, 0
    %786 = vmatpush.msra.mxu0 0.0
    %787 = vmatpush.msra.mxu0 0.0
    %788 = vmatpush.msra.mxu0 0.0
    %789 = vmatpush.msra.mxu0 0.0
    %790 = vmatpush.msra.mxu0 0.0
    %791 = vmatpush.msra.mxu0 0.0
    %792 = vmatpush.msra.mxu0 0.0
    %793 = vmatpush.msra.mxu0 0.0
    %794 = vmatpush.msra.mxu0 0.0
    %795 = vmatpush.msra.mxu0 0.0
    %796 = vmatpush.msra.mxu0 0.0
    %797 = vmatpush.msra.mxu0 0.0
    %798 = vmatpush.msra.mxu0 0.0
    %799 = vmatpush.msra.mxu0 0.0
    %800 = vmatpush.msra.mxu0 0.0
    %801 = vmatpush.msra.mxu0 %v744
    %802 = vmatmul.f32.gmra.mxu0 %v784
    %v803 = vpop.f32.mrf.mxu0
    %v804 = vadd.f32 0.0, %v803
    %805 = vdwg.mxu0
    %807 = vset.pattern.permute.xlu0 0
    %808 = vperm.xlu0 %807, %v95
    %v809 = vpop.permute.xlu0 %808
    %v811 = vmul.f32 %v809, %v804
    %812 = vset.pattern.permute.xlu0 1
    %813 = vperm.xlu0 %812, %v95
    %v814 = vpop.permute.xlu0 %813
    %v816 = vmul.f32 %v814, %v804
    %818 = vrot.lane.b32.xlu0 %v816, 120
    %v819 = vpop.permute.xlu0 %818
    %v821 = vadd.f32 %v811, %v819
    %822 = vset.pattern.permute.xlu0 2
    %823 = vperm.xlu0 %822, %v95
    %v824 = vpop.permute.xlu0 %823
    %v826 = vmul.f32 %v824, %v804
    %828 = vrot.lane.b32.xlu0 %v826, 112
    %v829 = vpop.permute.xlu0 %828
    %v831 = vadd.f32 %v821, %v829
    %832 = vset.pattern.permute.xlu0 3
    %833 = vperm.xlu0 %832, %v95
    %v834 = vpop.permute.xlu0 %833
    %v836 = vmul.f32 %v834, %v804
    %838 = vrot.lane.b32.xlu0 %v836, 104
    %v839 = vpop.permute.xlu0 %838
    %v841 = vadd.f32 %v831, %v839
    %842 = vset.pattern.permute.xlu0 4
    %843 = vperm.xlu0 %842, %v95
    %v844 = vpop.permute.xlu0 %843
    %v846 = vmul.f32 %v844, %v804
    %848 = vrot.lane.b32.xlu0 %v846, 96
    %v849 = vpop.permute.xlu0 %848
    %v851 = vadd.f32 %v841, %v849
    %852 = vset.pattern.permute.xlu0 5
    %853 = vperm.xlu0 %852, %v95
    %v854 = vpop.permute.xlu0 %853
    %v856 = vmul.f32 %v854, %v804
    %858 = vrot.lane.b32.xlu0 %v856, 88
    %v859 = vpop.permute.xlu0 %858
    %v861 = vadd.f32 %v851, %v859
    %862 = vset.pattern.permute.xlu0 6
    %863 = vperm.xlu0 %862, %v95
    %v864 = vpop.permute.xlu0 %863
    %v866 = vmul.f32 %v864, %v804
    %868 = vrot.lane.b32.xlu0 %v866, 80
    %v869 = vpop.permute.xlu0 %868
    %v871 = vadd.f32 %v861, %v869
    %872 = vset.pattern.permute.xlu0 7
    %873 = vperm.xlu0 %872, %v95
    %v874 = vpop.permute.xlu0 %873
    %v876 = vmul.f32 %v874, %v804
    %878 = vrot.lane.b32.xlu0 %v876, 72
    %v879 = vpop.permute.xlu0 %878
    %v881 = vadd.f32 %v871, %v879
    %883 = vrot.lane.b32.xlu0 %v881, 16
    %v884 = vpop.permute.xlu0 %883
    %vm886 = vcmask 195712
    %887 = vst.msk [vmem:[%s8] sm:$0xff] %vm886, %v884
    %889 = vset.pattern.permute.xlu0 0
    %890 = vperm.xlu0 %889, %v96
    %v891 = vpop.permute.xlu0 %890
    %v893 = vmul.f32 %v891, %v804
    %894 = vset.pattern.permute.xlu0 1
    %895 = vperm.xlu0 %894, %v96
    %v896 = vpop.permute.xlu0 %895
    %v898 = vmul.f32 %v896, %v804
    %900 = vrot.lane.b32.xlu0 %v898, 120
    %v901 = vpop.permute.xlu0 %900
    %v903 = vadd.f32 %v893, %v901
    %904 = vset.pattern.permute.xlu0 2
    %905 = vperm.xlu0 %904, %v96
    %v906 = vpop.permute.xlu0 %905
    %v908 = vmul.f32 %v906, %v804
    %910 = vrot.lane.b32.xlu0 %v908, 112
    %v911 = vpop.permute.xlu0 %910
    %v913 = vadd.f32 %v903, %v911
    %914 = vset.pattern.permute.xlu0 3
    %915 = vperm.xlu0 %914, %v96
    %v916 = vpop.permute.xlu0 %915
    %v918 = vmul.f32 %v916, %v804
    %920 = vrot.lane.b32.xlu0 %v918, 104
    %v921 = vpop.permute.xlu0 %920
    %v923 = vadd.f32 %v913, %v921
    %924 = vset.pattern.permute.xlu0 4
    %925 = vperm.xlu0 %924, %v96
    %v926 = vpop.permute.xlu0 %925
    %v928 = vmul.f32 %v926, %v804
    %930 = vrot.lane.b32.xlu0 %v928, 96
    %v931 = vpop.permute.xlu0 %930
    %v933 = vadd.f32 %v923, %v931
    %934 = vset.pattern.permute.xlu0 5
    %935 = vperm.xlu0 %934, %v96
    %v936 = vpop.permute.xlu0 %935
    %v938 = vmul.f32 %v936, %v804
    %940 = vrot.lane.b32.xlu0 %v938, 88
    %v941 = vpop.permute.xlu0 %940
    %v943 = vadd.f32 %v933, %v941
    %944 = vset.pattern.permute.xlu0 6
    %945 = vperm.xlu0 %944, %v96
    %v946 = vpop.permute.xlu0 %945
    %v948 = vmul.f32 %v946, %v804
    %950 = vrot.lane.b32.xlu0 %v948, 80
    %v951 = vpop.permute.xlu0 %950
    %v953 = vadd.f32 %v943, %v951
    %954 = vset.pattern.permute.xlu0 7
    %955 = vperm.xlu0 %954, %v96
    %v956 = vpop.permute.xlu0 %955
    %v958 = vmul.f32 %v956, %v804
    %960 = vrot.lane.b32.xlu0 %v958, 72
    %v961 = vpop.permute.xlu0 %960
    %v963 = vadd.f32 %v953, %v961
    %965 = vrot.lane.b32.xlu0 %v963, 40
    %v966 = vpop.permute.xlu0 %965
    %vm968 = vcmask 392512
    %969 = vst.msk [vmem:[%s8] sm:$0xff] %vm968, %v966
    %971 = vset.pattern.permute.xlu0 0
    %972 = vperm.xlu0 %971, %v97
    %v973 = vpop.permute.xlu0 %972
    %v975 = vmul.f32 %v973, %v804
    %976 = vset.pattern.permute.xlu0 1
    %977 = vperm.xlu0 %976, %v97
    %v978 = vpop.permute.xlu0 %977
    %v980 = vmul.f32 %v978, %v804
    %982 = vrot.lane.b32.xlu0 %v980, 120
    %v983 = vpop.permute.xlu0 %982
    %v985 = vadd.f32 %v975, %v983
    %986 = vset.pattern.permute.xlu0 2
    %987 = vperm.xlu0 %986, %v97
    %v988 = vpop.permute.xlu0 %987
    %v990 = vmul.f32 %v988, %v804
    %992 = vrot.lane.b32.xlu0 %v990, 112
    %v993 = vpop.permute.xlu0 %992
    %v995 = vadd.f32 %v985, %v993
    %996 = vset.pattern.permute.xlu0 3
    %997 = vperm.xlu0 %996, %v97
    %v998 = vpop.permute.xlu0 %997
    %v1000 = vmul.f32 %v998, %v804
    %1002 = vrot.lane.b32.xlu0 %v1000, 104
    %v1003 = vpop.permute.xlu0 %1002
    %v1005 = vadd.f32 %v995, %v1003
    %1006 = vset.pattern.permute.xlu0 4
    %1007 = vperm.xlu0 %1006, %v97
    %v1008 = vpop.permute.xlu0 %1007
    %v1010 = vmul.f32 %v1008, %v804
    %1012 = vrot.lane.b32.xlu0 %v1010, 96
    %v1013 = vpop.permute.xlu0 %1012
    %v1015 = vadd.f32 %v1005, %v1013
    %1016 = vset.pattern.permute.xlu0 5
    %1017 = vperm.xlu0 %1016, %v97
    %v1018 = vpop.permute.xlu0 %1017
    %v1020 = vmul.f32 %v1018, %v804
    %1022 = vrot.lane.b32.xlu0 %v1020, 88
    %v1023 = vpop.permute.xlu0 %1022
    %v1025 = vadd.f32 %v1015, %v1023
    %1026 = vset.pattern.permute.xlu0 6
    %1027 = vperm.xlu0 %1026, %v97
    %v1028 = vpop.permute.xlu0 %1027
    %v1030 = vmul.f32 %v1028, %v804
    %1032 = vrot.lane.b32.xlu0 %v1030, 80
    %v1033 = vpop.permute.xlu0 %1032
    %v1035 = vadd.f32 %v1025, %v1033
    %1036 = vset.pattern.permute.xlu0 7
    %1037 = vperm.xlu0 %1036, %v97
    %v1038 = vpop.permute.xlu0 %1037
    %v1040 = vmul.f32 %v1038, %v804
    %1042 = vrot.lane.b32.xlu0 %v1040, 72
    %v1043 = vpop.permute.xlu0 %1042
    %v1045 = vadd.f32 %v1035, %v1043
    %1047 = vrot.lane.b32.xlu0 %v1045, 64
    %v1048 = vpop.permute.xlu0 %1047
    %vm1050 = vcmask 589312
    %1051 = vst.msk [vmem:[%s8] sm:$0xff] %vm1050, %v1048
    // Predicated region
    $region50: #{murenn_direct_forward.1} parent=1 // pred_check
      _
    $region51: #{murenn_direct_forward.1} parent=1 // pred_check_branch
      %1053 = sbr.rel (0) target = $region53
    $region52: #{murenn_direct_forward.1} parent=1 // pred_region
      _
    $region53: #{murenn_direct_forward.1} parent=1 // pred_fallthru
      _
    // Predicated region
    $region54: #{murenn_direct_forward.1} parent=1 // pred_check
      _
    $region55: #{murenn_direct_forward.1} parent=1 // pred_check_branch
      %1055 = sbr.rel (0) target = $region57
    $region56: #{murenn_direct_forward.1} parent=1 // pred_region
      _
    $region57: #{murenn_direct_forward.1} parent=1 // pred_fallthru
      _
    %1056 = vsyncpa [#allocation3], 1
    %1057 = vsyncpa [#allocation5], 1
    %1058 = vsyncpa [#allocation8], 1

</llo_original>
